<compile_context>
chip_gen: v7x
topology: tpu7x:2x2x1
jax: 0.10.0
libtpu: 0.0.40
codegen_flags: <defaults>
</compile_context>

<pallas_src>
import jax
import jax.numpy as jnp
import numpy as np
from jax.experimental import pallas as pl
from jax.experimental.pallas import tpu as pltpu


def coord_att_kernel(x_ref, w1_ref, b1_ref, w2_ref, b2_ref, w3_ref, b3_ref, o_ref):
    """One grid step: a (Nb, H, W, C) slab, channels on lanes."""
    x = x_ref[...].astype(jnp.float32)            # (Nb, H, W, C)
    nb, h, w, c = x.shape

    # Adaptive average pools.
    x_h = jnp.mean(x, axis=2)                     # (Nb, H, C)  mean over W (sublane reduce)
    x_w = jnp.mean(x, axis=1)                     # (Nb, W, C)  mean over H (outer-dim reduce)

    # Batched 1x1 convs as channel-dim matmuls on the MXU (RHS width Nb*H / Nb*W).
    yh = x_h.reshape(nb * h, c)
    yw = x_w.reshape(nb * w, c)

    # conv1 with BatchNorm pre-folded into (w1, b1); weights shared by both branches.
    yh = jnp.dot(yh, w1_ref[...], preferred_element_type=jnp.float32) + b1_ref[...]  # (Nb*H, MIP)
    yw = jnp.dot(yw, w1_ref[...], preferred_element_type=jnp.float32) + b1_ref[...]  # (Nb*W, MIP)

    # h_swish: x * relu6(x + 3) / 6
    yh = yh * jnp.clip(yh + 3.0, 0.0, 6.0) * (1.0 / 6.0)
    yw = yw * jnp.clip(yw + 3.0, 0.0, 6.0) * (1.0 / 6.0)

    # conv2 / conv3 + sigmoid gates.
    a_h = jax.nn.sigmoid(
        jnp.dot(yh, w2_ref[...], preferred_element_type=jnp.float32) + b2_ref[...])  # (Nb*H, OUP)
    a_w = jax.nn.sigmoid(
        jnp.dot(yw, w3_ref[...], preferred_element_type=jnp.float32) + b3_ref[...])  # (Nb*W, OUP)

    oup = a_h.shape[-1]
    a_h = a_h.reshape(nb, h, 1, oup)              # broadcast over W (sublane dim)
    a_w = a_w.reshape(nb, 1, w, oup)              # broadcast over H (outer dim)

    # identity * x_w * x_h  -- fully lane-dense elementwise product.
    o_ref[...] = (x * a_h * a_w).astype(o_ref.dtype)


def coord_att(x, p, eps=1e-5, data_format="NCHW"):
    """Forward pass of CoordAtt. `x` is NCHW (PyTorch layout) by default."""
    if data_format == "NCHW":
        x_nhwc = jnp.transpose(x, (0, 2, 3, 1))   # layout plumbing to get C on lanes
    elif data_format == "NHWC":
        x_nhwc = x
    else:
        raise ValueError(data_format)

    n, h, w, c = x_nhwc.shape
    mip = p["w1"].shape[0]
    oup = p["w2"].shape[0]
    assert oup == c, "output channels must match input channels for the final product"

    # ---- Host-side parameter prep -------------------------------------------------
    # Fold BatchNorm (inference stats) into conv1:  w1' = s*w1, b1' = s*(b1-mean)+beta
    scale = p["gamma"][:, 0] * jax.lax.rsqrt(p["var"][:, 0] + eps)        # (mip,)
    w1t = (p["w1"] * scale[:, None]).T                                    # (C, MIP)
    b1f = (scale * (p["b1"][:, 0] - p["mean"][:, 0]) + p["beta"][:, 0])[None, :]  # (1, MIP)
    w2t = p["w2"].T                                                       # (MIP, OUP)
    b2 = p["b2"][:, 0][None, :]                                           # (1, OUP)
    w3t = p["w3"].T                                                       # (MIP, OUP)
    b3 = p["b3"][:, 0][None, :]                                           # (1, OUP)

    # ---- Pick batch block size from a VMEM budget ---------------------------------
    # Pipeline holds ~ (in + out) x double-buffer = 4 slabs of Nb*H*W*C elements.
    itemsize = jnp.dtype(x_nhwc.dtype).itemsize
    bytes_per_n = h * w * c * itemsize
    vmem_slab_budget = 24 * 1024 * 1024            # leave headroom under v7x's 64 MiB
    nb_max = max(1, int(vmem_slab_budget // (4 * bytes_per_n)))
    nb = max(d for d in range(1, n + 1) if n % d == 0 and d <= nb_max)

    x_spec = pl.BlockSpec((nb, h, w, c), lambda i: (i, 0, 0, 0))

    out_nhwc = pl.pallas_call(
        coord_att_kernel,
        grid=(n // nb,),
        in_specs=[
            x_spec,
            pl.BlockSpec((c, mip), lambda i: (0, 0)),      # conv1 weight (BN folded)
            pl.BlockSpec((1, mip), lambda i: (0, 0)),      # conv1 bias   (BN folded)
            pl.BlockSpec((mip, oup), lambda i: (0, 0)),    # conv2 weight
            pl.BlockSpec((1, oup), lambda i: (0, 0)),      # conv2 bias
            pl.BlockSpec((mip, oup), lambda i: (0, 0)),    # conv3 weight
            pl.BlockSpec((1, oup), lambda i: (0, 0)),      # conv3 bias
        ],
        out_specs=pl.BlockSpec((nb, h, w, c), lambda i: (i, 0, 0, 0)),
        out_shape=jax.ShapeDtypeStruct((n, h, w, c), x.dtype),
        compiler_params=pltpu.CompilerParams(
            dimension_semantics=("parallel",),             # batch steps are independent
            vmem_limit_bytes=48 * 1024 * 1024,
        ),
    )(x_nhwc, w1t, b1f, w2t, b2, w3t, b3)

    if data_format == "NCHW":
        return jnp.transpose(out_nhwc, (0, 3, 1, 2))
    return out_nhwc


def coord_att_ref(x, p, eps=1e-5):
    """Pure-JAX reference mirroring the PyTorch forward exactly (NCHW)."""
    n, c, h, w = x.shape
    x_h = jnp.mean(x, axis=3)                        # (n, c, h)   pool_h
    x_w = jnp.mean(x, axis=2)                        # (n, c, w)   pool_w (permuted)
    y = jnp.concatenate([x_h, x_w], axis=2)          # (n, c, h+w)
    y1 = jnp.einsum("mc,ncs->nms", p["w1"], y, precision="highest") + p["b1"][None]
    y1 = (y1 - p["mean"][None]) * jax.lax.rsqrt(p["var"][None] + eps) * p["gamma"][None] + p["beta"][None]
    y1 = y1 * jnp.clip(y1 + 3.0, 0.0, 6.0) / 6.0
    yh, yw = y1[:, :, :h], y1[:, :, h:]
    a_h = jax.nn.sigmoid(jnp.einsum("om,nms->nos", p["w2"], yh, precision="highest") + p["b2"][None])
    a_w = jax.nn.sigmoid(jnp.einsum("om,nms->nos", p["w3"], yw, precision="highest") + p["b3"][None])
    return x * a_h[:, :, :, None] * a_w[:, :, None, :]


def make_params(inp, oup, groups=8, dtype=jnp.float32):
    mip = max(8, inp // groups)
    key = jax.random.PRNGKey(0)
    ks = jax.random.split(key, 10)
    p = {
        # Conv2d weights are (out, in, 1, 1) in PyTorch -> squeezed to (out, in)
        "w1": 0.3 * jax.random.normal(ks[0], (mip, inp), dtype),
        "b1": 0.1 * jax.random.normal(ks[1], (mip, 1), dtype),
        "gamma": 1.0 + 0.1 * jax.random.normal(ks[2], (mip, 1), dtype),
        "beta": 0.1 * jax.random.normal(ks[3], (mip, 1), dtype),
        "mean": 0.1 * jax.random.normal(ks[4], (mip, 1), dtype),
        "var": 0.5 + jnp.abs(jax.random.normal(ks[5], (mip, 1), dtype)),
        "w2": 0.3 * jax.random.normal(ks[6], (oup, mip), dtype),
        "b2": 0.1 * jax.random.normal(ks[7], (oup, 1), dtype),
        "w3": 0.3 * jax.random.normal(ks[8], (oup, mip), dtype),
        "b3": 0.1 * jax.random.normal(ks[9], (oup, 1), dtype),
    }
    return p


if __name__ == "__main__":
    # Small shapes consistent with the module: N=2, C=inp=oup=4, H=W=16, groups=8 -> mip=8
    n, c, h, w = 2, 4, 16, 16
    key = jax.random.PRNGKey(0)
    x = jax.random.normal(key, (n, c, h, w), jnp.float32)
    params = make_params(inp=c, oup=c, groups=8)

    out = coord_att(x, params)
    out = jax.block_until_ready(out)

    ref = coord_att_ref(x, params)
    np.testing.assert_allclose(np.asarray(out), np.asarray(ref), atol=2e-3, rtol=2e-3)

    print("KERNEL_OK")
</pallas_src>

<mosaic_0001>
module attributes {stable_mosaic.version = 11 : i64} {
  func.func @coord_att_kernel(%arg0: i32, %arg1: memref<2x16x16x4xf32, #tpu.memory_space<vmem>>, %arg2: memref<4x8xf32, #tpu.memory_space<vmem>>, %arg3: memref<1x8xf32, #tpu.memory_space<vmem>>, %arg4: memref<8x4xf32, #tpu.memory_space<vmem>>, %arg5: memref<1x4xf32, #tpu.memory_space<vmem>>, %arg6: memref<8x4xf32, #tpu.memory_space<vmem>>, %arg7: memref<1x4xf32, #tpu.memory_space<vmem>>, %arg8: memref<2x16x16x4xf32, #tpu.memory_space<vmem>>) attributes {dimension_semantics = [#tpu.dimension_semantics<parallel>], iteration_bounds = array<i64: 1>, scalar_prefetch = 0 : i64, scratch_operands = 0 : i64, tpu.core_type = #tpu.core_type<tc>, window_params = [{transform_indices = @transform_0, window_bounds = array<i64: 2, 16, 16, 4>}, {pipeline_mode = #tpu.pipeline_mode<synchronous>, transform_indices = @transform_1, window_bounds = array<i64: 4, 8>}, {pipeline_mode = #tpu.pipeline_mode<synchronous>, transform_indices = @transform_2, window_bounds = array<i64: 1, 8>}, {pipeline_mode = #tpu.pipeline_mode<synchronous>, transform_indices = @transform_3, window_bounds = array<i64: 8, 4>}, {pipeline_mode = #tpu.pipeline_mode<synchronous>, transform_indices = @transform_4, window_bounds = array<i64: 1, 4>}, {pipeline_mode = #tpu.pipeline_mode<synchronous>, transform_indices = @transform_5, window_bounds = array<i64: 8, 4>}, {pipeline_mode = #tpu.pipeline_mode<synchronous>, transform_indices = @transform_6, window_bounds = array<i64: 1, 4>}, {transform_indices = @transform_7, window_bounds = array<i64: 2, 16, 16, 4>}]} {
    %c0 = arith.constant 0 : index
    %c0_0 = arith.constant 0 : index
    %c0_1 = arith.constant 0 : index
    %c0_2 = arith.constant 0 : index
    %0 = vector.load %arg1[%c0, %c0_0, %c0_1, %c0_2] : memref<2x16x16x4xf32, #tpu.memory_space<vmem>>, vector<2x16x16x4xf32>
    %cst = arith.constant dense<0.000000e+00> : vector<2x16x4xf32>
    %1 = vector.multi_reduction <add>, %0, %cst [2] : vector<2x16x16x4xf32> to vector<2x16x4xf32>
    %cst_3 = arith.constant 1.600000e+01 : f32
    %2 = vector.broadcast %cst_3 : f32 to vector<2x16x4xf32>
    %3 = arith.divf %1, %2 : vector<2x16x4xf32>
    %cst_4 = arith.constant dense<0.000000e+00> : vector<2x16x4xf32>
    %4 = vector.multi_reduction <add>, %0, %cst_4 [1] : vector<2x16x16x4xf32> to vector<2x16x4xf32>
    %cst_5 = arith.constant 1.600000e+01 : f32
    %5 = vector.broadcast %cst_5 : f32 to vector<2x16x4xf32>
    %6 = arith.divf %4, %5 : vector<2x16x4xf32>
    %7 = vector.shape_cast %3 : vector<2x16x4xf32> to vector<32x4xf32>
    %8 = vector.shape_cast %6 : vector<2x16x4xf32> to vector<32x4xf32>
    %c0_6 = arith.constant 0 : index
    %c0_7 = arith.constant 0 : index
    %9 = vector.load %arg2[%c0_6, %c0_7] : memref<4x8xf32, #tpu.memory_space<vmem>>, vector<4x8xf32>
    %cst_8 = arith.constant dense<0.000000e+00> : vector<32x8xf32>
    %10 = tpu.matmul %7, %9, %cst_8 {dimension_numbers = #tpu.dot_dimension_numbers<[1], [0], [0], [1], [0, 0, 1, 1], [], []>} : vector<32x4xf32>, vector<4x8xf32>, vector<32x8xf32> -> vector<32x8xf32>
    %c0_9 = arith.constant 0 : index
    %c0_10 = arith.constant 0 : index
    %11 = vector.load %arg3[%c0_9, %c0_10] : memref<1x8xf32, #tpu.memory_space<vmem>>, vector<1x8xf32>
    %12 = vector.broadcast %11 : vector<1x8xf32> to vector<32x8xf32>
    %13 = arith.addf %10, %12 : vector<32x8xf32>
    %c0_11 = arith.constant 0 : index
    %c0_12 = arith.constant 0 : index
    %14 = vector.load %arg2[%c0_11, %c0_12] : memref<4x8xf32, #tpu.memory_space<vmem>>, vector<4x8xf32>
    %cst_13 = arith.constant dense<0.000000e+00> : vector<32x8xf32>
    %15 = tpu.matmul %8, %14, %cst_13 {dimension_numbers = #tpu.dot_dimension_numbers<[1], [0], [0], [1], [0, 0, 1, 1], [], []>} : vector<32x4xf32>, vector<4x8xf32>, vector<32x8xf32> -> vector<32x8xf32>
    %c0_14 = arith.constant 0 : index
    %c0_15 = arith.constant 0 : index
    %16 = vector.load %arg3[%c0_14, %c0_15] : memref<1x8xf32, #tpu.memory_space<vmem>>, vector<1x8xf32>
    %17 = vector.broadcast %16 : vector<1x8xf32> to vector<32x8xf32>
    %18 = arith.addf %15, %17 : vector<32x8xf32>
    %cst_16 = arith.constant 3.000000e+00 : f32
    %19 = vector.broadcast %cst_16 : f32 to vector<32x8xf32>
    %20 = arith.addf %13, %19 : vector<32x8xf32>
    %cst_17 = arith.constant 0.000000e+00 : f32
    %cst_18 = arith.constant 6.000000e+00 : f32
    %21 = vector.broadcast %cst_17 : f32 to vector<32x8xf32>
    %22 = arith.maximumf %21, %20 : vector<32x8xf32>
    %23 = vector.broadcast %cst_18 : f32 to vector<32x8xf32>
    %24 = arith.minimumf %23, %22 : vector<32x8xf32>
    %25 = arith.mulf %13, %24 : vector<32x8xf32>
    %cst_19 = arith.constant 0.166666672 : f32
    %26 = vector.broadcast %cst_19 : f32 to vector<32x8xf32>
    %27 = arith.mulf %25, %26 : vector<32x8xf32>
    %cst_20 = arith.constant 3.000000e+00 : f32
    %28 = vector.broadcast %cst_20 : f32 to vector<32x8xf32>
    %29 = arith.addf %18, %28 : vector<32x8xf32>
    %cst_21 = arith.constant 0.000000e+00 : f32
    %cst_22 = arith.constant 6.000000e+00 : f32
    %30 = vector.broadcast %cst_21 : f32 to vector<32x8xf32>
    %31 = arith.maximumf %30, %29 : vector<32x8xf32>
    %32 = vector.broadcast %cst_22 : f32 to vector<32x8xf32>
    %33 = arith.minimumf %32, %31 : vector<32x8xf32>
    %34 = arith.mulf %18, %33 : vector<32x8xf32>
    %cst_23 = arith.constant 0.166666672 : f32
    %35 = vector.broadcast %cst_23 : f32 to vector<32x8xf32>
    %36 = arith.mulf %34, %35 : vector<32x8xf32>
    %c0_24 = arith.constant 0 : index
    %c0_25 = arith.constant 0 : index
    %37 = vector.load %arg4[%c0_24, %c0_25] : memref<8x4xf32, #tpu.memory_space<vmem>>, vector<8x4xf32>
    %cst_26 = arith.constant dense<0.000000e+00> : vector<32x4xf32>
    %38 = tpu.matmul %27, %37, %cst_26 {dimension_numbers = #tpu.dot_dimension_numbers<[1], [0], [0], [1], [0, 0, 1, 1], [], []>} : vector<32x8xf32>, vector<8x4xf32>, vector<32x4xf32> -> vector<32x4xf32>
    %c0_27 = arith.constant 0 : index
    %c0_28 = arith.constant 0 : index
    %39 = vector.load %arg5[%c0_27, %c0_28] : memref<1x4xf32, #tpu.memory_space<vmem>>, vector<1x4xf32>
    %40 = vector.broadcast %39 : vector<1x4xf32> to vector<32x4xf32>
    %41 = arith.addf %38, %40 : vector<32x4xf32>
    %42 = arith.negf %41 : vector<32x4xf32>
    %43 = math.exp %42 : vector<32x4xf32>
    %cst_29 = arith.constant 1.000000e+00 : f32
    %44 = vector.broadcast %cst_29 : f32 to vector<32x4xf32>
    %45 = arith.addf %44, %43 : vector<32x4xf32>
    %46 = arith.divf %44, %45 : vector<32x4xf32>
    %c0_30 = arith.constant 0 : index
    %c0_31 = arith.constant 0 : index
    %47 = vector.load %arg6[%c0_30, %c0_31] : memref<8x4xf32, #tpu.memory_space<vmem>>, vector<8x4xf32>
    %cst_32 = arith.constant dense<0.000000e+00> : vector<32x4xf32>
    %48 = tpu.matmul %36, %47, %cst_32 {dimension_numbers = #tpu.dot_dimension_numbers<[1], [0], [0], [1], [0, 0, 1, 1], [], []>} : vector<32x8xf32>, vector<8x4xf32>, vector<32x4xf32> -> vector<32x4xf32>
    %c0_33 = arith.constant 0 : index
    %c0_34 = arith.constant 0 : index
    %49 = vector.load %arg7[%c0_33, %c0_34] : memref<1x4xf32, #tpu.memory_space<vmem>>, vector<1x4xf32>
    %50 = vector.broadcast %49 : vector<1x4xf32> to vector<32x4xf32>
    %51 = arith.addf %48, %50 : vector<32x4xf32>
    %52 = arith.negf %51 : vector<32x4xf32>
    %53 = math.exp %52 : vector<32x4xf32>
    %cst_35 = arith.constant 1.000000e+00 : f32
    %54 = vector.broadcast %cst_35 : f32 to vector<32x4xf32>
    %55 = arith.addf %54, %53 : vector<32x4xf32>
    %56 = arith.divf %54, %55 : vector<32x4xf32>
    %57 = vector.shape_cast %46 : vector<32x4xf32> to vector<2x16x1x4xf32>
    %58 = vector.shape_cast %56 : vector<32x4xf32> to vector<2x1x16x4xf32>
    %59 = vector.broadcast %57 : vector<2x16x1x4xf32> to vector<2x16x16x4xf32>
    %60 = arith.mulf %0, %59 : vector<2x16x16x4xf32>
    %61 = vector.broadcast %58 : vector<2x1x16x4xf32> to vector<2x16x16x4xf32>
    %62 = arith.mulf %60, %61 : vector<2x16x16x4xf32>
    %c0_36 = arith.constant 0 : index
    %c0_37 = arith.constant 0 : index
    %c0_38 = arith.constant 0 : index
    %c0_39 = arith.constant 0 : index
    %63 = vector.load %arg8[%c0_36, %c0_37, %c0_38, %c0_39] : memref<2x16x16x4xf32, #tpu.memory_space<vmem>>, vector<2x16x16x4xf32>
    tpu.vector_store %arg8[%c0_36, %c0_37, %c0_38, %c0_39], %62 {strides = array<i32>} : memref<2x16x16x4xf32, #tpu.memory_space<vmem>>, vector<2x16x16x4xf32>,
    return
  }
  func.func @transform_0(%arg0: i32) -> (i32, i32, i32, i32) {
    %c0_i32 = arith.constant 0 : i32
    %c0_i32_0 = arith.constant 0 : i32
    %c0_i32_1 = arith.constant 0 : i32
    %c0_i32_2 = arith.constant 0 : i32
    return %arg0, %c0_i32, %c0_i32_0, %c0_i32_1 : i32, i32, i32, i32
  }
  func.func @transform_1(%arg0: i32) -> (i32, i32) {
    %c0_i32 = arith.constant 0 : i32
    %c0_i32_0 = arith.constant 0 : i32
    %c0_i32_1 = arith.constant 0 : i32
    return %c0_i32, %c0_i32_0 : i32, i32
  }
  func.func @transform_2(%arg0: i32) -> (i32, i32) {
    %c0_i32 = arith.constant 0 : i32
    %c0_i32_0 = arith.constant 0 : i32
    %c0_i32_1 = arith.constant 0 : i32
    return %c0_i32, %c0_i32_0 : i32, i32
  }
  func.func @transform_3(%arg0: i32) -> (i32, i32) {
    %c0_i32 = arith.constant 0 : i32
    %c0_i32_0 = arith.constant 0 : i32
    %c0_i32_1 = arith.constant 0 : i32
    return %c0_i32, %c0_i32_0 : i32, i32
  }
  func.func @transform_4(%arg0: i32) -> (i32, i32) {
    %c0_i32 = arith.constant 0 : i32
    %c0_i32_0 = arith.constant 0 : i32
    %c0_i32_1 = arith.constant 0 : i32
    return %c0_i32, %c0_i32_0 : i32, i32
  }
  func.func @transform_5(%arg0: i32) -> (i32, i32) {
    %c0_i32 = arith.constant 0 : i32
    %c0_i32_0 = arith.constant 0 : i32
    %c0_i32_1 = arith.constant 0 : i32
    return %c0_i32, %c0_i32_0 : i32, i32
  }
  func.func @transform_6(%arg0: i32) -> (i32, i32) {
    %c0_i32 = arith.constant 0 : i32
    %c0_i32_0 = arith.constant 0 : i32
    %c0_i32_1 = arith.constant 0 : i32
    return %c0_i32, %c0_i32_0 : i32, i32
  }
  func.func @transform_7(%arg0: i32) -> (i32, i32, i32, i32) {
    %c0_i32 = arith.constant 0 : i32
    %c0_i32_0 = arith.constant 0 : i32
    %c0_i32_1 = arith.constant 0 : i32
    %c0_i32_2 = arith.constant 0 : i32
    return %arg0, %c0_i32, %c0_i32_0, %c0_i32_1 : i32, i32, i32, i32
  }
}

</mosaic_0001>

<llo_original>
// kernel: tpu_custom_call.1
$region0: #{tpu_custom_call.1}
  #allocation0 [shape = 'u32[]', space=smem, size = 0x4, offset = 0x4, fixed_abs, tag = 'smem constant byte address 0x4 - core index']
  #allocation1 [shape = 'u32[144,128]{1,0:T(1,128)}', space=vmem, size = 0x12000, scoped, tag = 'internal scratch']
  %s0 = inlined_call_operand.vmem [shape: f32[2,16,16,4], index: 0, kind: input, shape index: {}]
  %s1 = inlined_call_operand.vmem [shape: f32[4,8], index: 1, kind: input, shape index: {}]
  %s2 = inlined_call_operand.vmem [shape: f32[1,8], index: 2, kind: input, shape index: {}]
  %s3 = inlined_call_operand.vmem [shape: f32[8,4], index: 3, kind: input, shape index: {}]
  %s4 = inlined_call_operand.vmem [shape: f32[1,4], index: 4, kind: input, shape index: {}]
  %s5 = inlined_call_operand.vmem [shape: f32[8,4], index: 5, kind: input, shape index: {}]
  %s6 = inlined_call_operand.vmem [shape: f32[1,4], index: 6, kind: input, shape index: {}]
  %s7 = inlined_call_operand.vmem [shape: f32[2,16,16,4], index: 7, kind: output, shape index: {}]
  %s8 = sld [smem:[#allocation0]]
  $region38: #{tpu_custom_call.1} parent=0
    _
  %s10 = ssub.s32 1, %s8
  %s11 = scalar_select 0, %s10, %s8
  // Predicated region
  $region2: #{tpu_custom_call.1} parent=0 // pred_check
    _
  $region3: #{tpu_custom_call.1} parent=0 // pred_check_branch
    %13 = sbr.rel (0) target = $region5
  $region4: #{tpu_custom_call.1} parent=0 // pred_region
    _
  $region5: #{tpu_custom_call.1} parent=0 // pred_fallthru
    _
  // Predicated region
  $region6: #{tpu_custom_call.1} parent=0 // pred_check
    _
  $region7: #{tpu_custom_call.1} parent=0 // pred_check_branch
    %15 = sbr.rel (0) target = $region9
  $region8: #{tpu_custom_call.1} parent=0 // pred_region
    _
  $region9: #{tpu_custom_call.1} parent=0 // pred_fallthru
    _
  // Predicated region
  $region10: #{tpu_custom_call.1} parent=0 // pred_check
    _
  $region11: #{tpu_custom_call.1} parent=0 // pred_check_branch
    %17 = sbr.rel (0) target = $region13
  $region12: #{tpu_custom_call.1} parent=0 // pred_region
    _
  $region13: #{tpu_custom_call.1} parent=0 // pred_fallthru
    _
  // Predicated region
  $region14: #{tpu_custom_call.1} parent=0 // pred_check
    _
  $region15: #{tpu_custom_call.1} parent=0 // pred_check_branch
    %19 = sbr.rel (0) target = $region17
  $region16: #{tpu_custom_call.1} parent=0 // pred_region
    _
  $region17: #{tpu_custom_call.1} parent=0 // pred_fallthru
    _
  // Predicated region
  $region18: #{tpu_custom_call.1} parent=0 // pred_check
    _
  $region19: #{tpu_custom_call.1} parent=0 // pred_check_branch
    %21 = sbr.rel (0) target = $region21
  $region20: #{tpu_custom_call.1} parent=0 // pred_region
    _
  $region21: #{tpu_custom_call.1} parent=0 // pred_fallthru
    _
  // Predicated region
  $region22: #{tpu_custom_call.1} parent=0 // pred_check
    _
  $region23: #{tpu_custom_call.1} parent=0 // pred_check_branch
    %23 = sbr.rel (0) target = $region25
  $region24: #{tpu_custom_call.1} parent=0 // pred_region
    _
  $region25: #{tpu_custom_call.1} parent=0 // pred_fallthru
    _
  // Predicated region
  $region26: #{tpu_custom_call.1} parent=0 // pred_check
    _
  $region27: #{tpu_custom_call.1} parent=0 // pred_check_branch
    %25 = sbr.rel (0) target = $region29
  $region28: #{tpu_custom_call.1} parent=0 // pred_region
    _
  $region29: #{tpu_custom_call.1} parent=0 // pred_fallthru
    _
  %v26 = vld [vmem:[%s0] sm:$0xff]
  %v27 = vld [vmem:[%s0 + $0x8] sm:$0xff]
  %v28 = vld [vmem:[%s0 + $0x10] sm:$0xff]
  %v29 = vld [vmem:[%s0 + $0x18] sm:$0xff]
  %v30 = vld [vmem:[%s0 + $0x20] sm:$0xff]
  %v31 = vld [vmem:[%s0 + $0x28] sm:$0xff]
  %v32 = vld [vmem:[%s0 + $0x30] sm:$0xff]
  %v33 = vld [vmem:[%s0 + $0x38] sm:$0xff]
  %v34 = vld [vmem:[%s0 + $0x40] sm:$0xff]
  %v35 = vld [vmem:[%s0 + $0x48] sm:$0xff]
  %v36 = vld [vmem:[%s0 + $0x50] sm:$0xff]
  %v37 = vld [vmem:[%s0 + $0x58] sm:$0xff]
  %v38 = vld [vmem:[%s0 + $0x60] sm:$0xff]
  %v39 = vld [vmem:[%s0 + $0x68] sm:$0xff]
  %v40 = vld [vmem:[%s0 + $0x70] sm:$0xff]
  %v41 = vld [vmem:[%s0 + $0x78] sm:$0xff]
  %v42 = vld [vmem:[%s0 + $0x80] sm:$0xff]
  %v43 = vld [vmem:[%s0 + $0x88] sm:$0xff]
  %v44 = vld [vmem:[%s0 + $0x90] sm:$0xff]
  %v45 = vld [vmem:[%s0 + $0x98] sm:$0xff]
  %v46 = vld [vmem:[%s0 + $0xa0] sm:$0xff]
  %v47 = vld [vmem:[%s0 + $0xa8] sm:$0xff]
  %v48 = vld [vmem:[%s0 + $0xb0] sm:$0xff]
  %v49 = vld [vmem:[%s0 + $0xb8] sm:$0xff]
  %v50 = vld [vmem:[%s0 + $0xc0] sm:$0xff]
  %v51 = vld [vmem:[%s0 + $0xc8] sm:$0xff]
  %v52 = vld [vmem:[%s0 + $0xd0] sm:$0xff]
  %v53 = vld [vmem:[%s0 + $0xd8] sm:$0xff]
  %v54 = vld [vmem:[%s0 + $0xe0] sm:$0xff]
  %v55 = vld [vmem:[%s0 + $0xe8] sm:$0xff]
  %v56 = vld [vmem:[%s0 + $0xf0] sm:$0xff]
  %v57 = vld [vmem:[%s0 + $0xf8] sm:$0xff]
  %v58 = vld [vmem:[%s0 + $0x100] sm:$0xff]
  %v59 = vld [vmem:[%s0 + $0x108] sm:$0xff]
  %v60 = vld [vmem:[%s0 + $0x110] sm:$0xff]
  %v61 = vld [vmem:[%s0 + $0x118] sm:$0xff]
  %v62 = vld [vmem:[%s0 + $0x120] sm:$0xff]
  %v63 = vld [vmem:[%s0 + $0x128] sm:$0xff]
  %v64 = vld [vmem:[%s0 + $0x130] sm:$0xff]
  %v65 = vld [vmem:[%s0 + $0x138] sm:$0xff]
  %v66 = vld [vmem:[%s0 + $0x140] sm:$0xff]
  %v67 = vld [vmem:[%s0 + $0x148] sm:$0xff]
  %v68 = vld [vmem:[%s0 + $0x150] sm:$0xff]
  %v69 = vld [vmem:[%s0 + $0x158] sm:$0xff]
  %v70 = vld [vmem:[%s0 + $0x160] sm:$0xff]
  %v71 = vld [vmem:[%s0 + $0x168] sm:$0xff]
  %v72 = vld [vmem:[%s0 + $0x170] sm:$0xff]
  %v73 = vld [vmem:[%s0 + $0x178] sm:$0xff]
  %v74 = vld [vmem:[%s0 + $0x180] sm:$0xff]
  %v75 = vld [vmem:[%s0 + $0x188] sm:$0xff]
  %v76 = vld [vmem:[%s0 + $0x190] sm:$0xff]
  %v77 = vld [vmem:[%s0 + $0x198] sm:$0xff]
  %v78 = vld [vmem:[%s0 + $0x1a0] sm:$0xff]
  %v79 = vld [vmem:[%s0 + $0x1a8] sm:$0xff]
  %v80 = vld [vmem:[%s0 + $0x1b0] sm:$0xff]
  %v81 = vld [vmem:[%s0 + $0x1b8] sm:$0xff]
  %v82 = vld [vmem:[%s0 + $0x1c0] sm:$0xff]
  %v83 = vld [vmem:[%s0 + $0x1c8] sm:$0xff]
  %v84 = vld [vmem:[%s0 + $0x1d0] sm:$0xff]
  %v85 = vld [vmem:[%s0 + $0x1d8] sm:$0xff]
  %v86 = vld [vmem:[%s0 + $0x1e0] sm:$0xff]
  %v87 = vld [vmem:[%s0 + $0x1e8] sm:$0xff]
  %v88 = vld [vmem:[%s0 + $0x1f0] sm:$0xff]
  %v89 = vld [vmem:[%s0 + $0x1f8] sm:$0xff]
  %vm90 = vcmask 31744
  %v91 = vsel %vm90, %v26, 0.0
  %v92 = vsel %vm90, %v27, 0.0
  %v93 = vadd.f32 %v91, %v92
  %v94 = vrot.slane %v93, 4
  %v95 = vadd.f32 %v93, %v94
  %v96 = vrot.slane %v95, 2
  %v97 = vadd.f32 %v95, %v96
  %v98 = vrot.slane %v97, 1
  %v99 = vadd.f32 %v97, %v98
  %v100 = vsel %vm90, %v28, 0.0
  %v101 = vsel %vm90, %v29, 0.0
  %v102 = vadd.f32 %v100, %v101
  %v103 = vrot.slane %v102, 4
  %v104 = vadd.f32 %v102, %v103
  %v105 = vrot.slane %v104, 2
  %v106 = vadd.f32 %v104, %v105
  %v107 = vrot.slane %v106, 1
  %v108 = vadd.f32 %v106, %v107
  %v109 = vsel %vm90, %v30, 0.0
  %v110 = vsel %vm90, %v31, 0.0
  %v111 = vadd.f32 %v109, %v110
  %v112 = vrot.slane %v111, 4
  %v113 = vadd.f32 %v111, %v112
  %v114 = vrot.slane %v113, 2
  %v115 = vadd.f32 %v113, %v114
  %v116 = vrot.slane %v115, 1
  %v117 = vadd.f32 %v115, %v116
  %v118 = vsel %vm90, %v32, 0.0
  %v119 = vsel %vm90, %v33, 0.0
  %v120 = vadd.f32 %v118, %v119
  %v121 = vrot.slane %v120, 4
  %v122 = vadd.f32 %v120, %v121
  %v123 = vrot.slane %v122, 2
  %v124 = vadd.f32 %v122, %v123
  %v125 = vrot.slane %v124, 1
  %v126 = vadd.f32 %v124, %v125
  %v127 = vsel %vm90, %v34, 0.0
  %v128 = vsel %vm90, %v35, 0.0
  %v129 = vadd.f32 %v127, %v128
  %v130 = vrot.slane %v129, 4
  %v131 = vadd.f32 %v129, %v130
  %v132 = vrot.slane %v131, 2
  %v133 = vadd.f32 %v131, %v132
  %v134 = vrot.slane %v133, 1
  %v135 = vadd.f32 %v133, %v134
  %v136 = vsel %vm90, %v36, 0.0
  %v137 = vsel %vm90, %v37, 0.0
  %v138 = vadd.f32 %v136, %v137
  %v139 = vrot.slane %v138, 4
  %v140 = vadd.f32 %v138, %v139
  %v141 = vrot.slane %v140, 2
  %v142 = vadd.f32 %v140, %v141
  %v143 = vrot.slane %v142, 1
  %v144 = vadd.f32 %v142, %v143
  %v145 = vsel %vm90, %v38, 0.0
  %v146 = vsel %vm90, %v39, 0.0
  %v147 = vadd.f32 %v145, %v146
  %v148 = vrot.slane %v147, 4
  %v149 = vadd.f32 %v147, %v148
  %v150 = vrot.slane %v149, 2
  %v151 = vadd.f32 %v149, %v150
  %v152 = vrot.slane %v151, 1
  %v153 = vadd.f32 %v151, %v152
  %v154 = vsel %vm90, %v40, 0.0
  %v155 = vsel %vm90, %v41, 0.0
  %v156 = vadd.f32 %v154, %v155
  %v157 = vrot.slane %v156, 4
  %v158 = vadd.f32 %v156, %v157
  %v159 = vrot.slane %v158, 2
  %v160 = vadd.f32 %v158, %v159
  %v161 = vrot.slane %v160, 1
  %v162 = vadd.f32 %v160, %v161
  %v163 = vsel %vm90, %v42, 0.0
  %v164 = vsel %vm90, %v43, 0.0
  %v165 = vadd.f32 %v163, %v164
  %v166 = vrot.slane %v165, 4
  %v167 = vadd.f32 %v165, %v166
  %v168 = vrot.slane %v167, 2
  %v169 = vadd.f32 %v167, %v168
  %v170 = vrot.slane %v169, 1
  %v171 = vadd.f32 %v169, %v170
  %v172 = vsel %vm90, %v44, 0.0
  %v173 = vsel %vm90, %v45, 0.0
  %v174 = vadd.f32 %v172, %v173
  %v175 = vrot.slane %v174, 4
  %v176 = vadd.f32 %v174, %v175
  %v177 = vrot.slane %v176, 2
  %v178 = vadd.f32 %v176, %v177
  %v179 = vrot.slane %v178, 1
  %v180 = vadd.f32 %v178, %v179
  %v181 = vsel %vm90, %v46, 0.0
  %v182 = vsel %vm90, %v47, 0.0
  %v183 = vadd.f32 %v181, %v182
  %v184 = vrot.slane %v183, 4
  %v185 = vadd.f32 %v183, %v184
  %v186 = vrot.slane %v185, 2
  %v187 = vadd.f32 %v185, %v186
  %v188 = vrot.slane %v187, 1
  %v189 = vadd.f32 %v187, %v188
  %v190 = vsel %vm90, %v48, 0.0
  %v191 = vsel %vm90, %v49, 0.0
  %v192 = vadd.f32 %v190, %v191
  %v193 = vrot.slane %v192, 4
  %v194 = vadd.f32 %v192, %v193
  %v195 = vrot.slane %v194, 2
  %v196 = vadd.f32 %v194, %v195
  %v197 = vrot.slane %v196, 1
  %v198 = vadd.f32 %v196, %v197
  %v199 = vsel %vm90, %v50, 0.0
  %v200 = vsel %vm90, %v51, 0.0
  %v201 = vadd.f32 %v199, %v200
  %v202 = vrot.slane %v201, 4
  %v203 = vadd.f32 %v201, %v202
  %v204 = vrot.slane %v203, 2
  %v205 = vadd.f32 %v203, %v204
  %v206 = vrot.slane %v205, 1
  %v207 = vadd.f32 %v205, %v206
  %v208 = vsel %vm90, %v52, 0.0
  %v209 = vsel %vm90, %v53, 0.0
  %v210 = vadd.f32 %v208, %v209
  %v211 = vrot.slane %v210, 4
  %v212 = vadd.f32 %v210, %v211
  %v213 = vrot.slane %v212, 2
  %v214 = vadd.f32 %v212, %v213
  %v215 = vrot.slane %v214, 1
  %v216 = vadd.f32 %v214, %v215
  %v217 = vsel %vm90, %v54, 0.0
  %v218 = vsel %vm90, %v55, 0.0
  %v219 = vadd.f32 %v217, %v218
  %v220 = vrot.slane %v219, 4
  %v221 = vadd.f32 %v219, %v220
  %v222 = vrot.slane %v221, 2
  %v223 = vadd.f32 %v221, %v222
  %v224 = vrot.slane %v223, 1
  %v225 = vadd.f32 %v223, %v224
  %v226 = vsel %vm90, %v56, 0.0
  %v227 = vsel %vm90, %v57, 0.0
  %v228 = vadd.f32 %v226, %v227
  %v229 = vrot.slane %v228, 4
  %v230 = vadd.f32 %v228, %v229
  %v231 = vrot.slane %v230, 2
  %v232 = vadd.f32 %v230, %v231
  %v233 = vrot.slane %v232, 1
  %v234 = vadd.f32 %v232, %v233
  %v235 = vsel %vm90, %v58, 0.0
  %v236 = vsel %vm90, %v59, 0.0
  %v237 = vadd.f32 %v235, %v236
  %v238 = vrot.slane %v237, 4
  %v239 = vadd.f32 %v237, %v238
  %v240 = vrot.slane %v239, 2
  %v241 = vadd.f32 %v239, %v240
  %v242 = vrot.slane %v241, 1
  %v243 = vadd.f32 %v241, %v242
  %v244 = vsel %vm90, %v60, 0.0
  %v245 = vsel %vm90, %v61, 0.0
  %v246 = vadd.f32 %v244, %v245
  %v247 = vrot.slane %v246, 4
  %v248 = vadd.f32 %v246, %v247
  %v249 = vrot.slane %v248, 2
  %v250 = vadd.f32 %v248, %v249
  %v251 = vrot.slane %v250, 1
  %v252 = vadd.f32 %v250, %v251
  %v253 = vsel %vm90, %v62, 0.0
  %v254 = vsel %vm90, %v63, 0.0
  %v255 = vadd.f32 %v253, %v254
  %v256 = vrot.slane %v255, 4
  %v257 = vadd.f32 %v255, %v256
  %v258 = vrot.slane %v257, 2
  %v259 = vadd.f32 %v257, %v258
  %v260 = vrot.slane %v259, 1
  %v261 = vadd.f32 %v259, %v260
  %v262 = vsel %vm90, %v64, 0.0
  %v263 = vsel %vm90, %v65, 0.0
  %v264 = vadd.f32 %v262, %v263
  %v265 = vrot.slane %v264, 4
  %v266 = vadd.f32 %v264, %v265
  %v267 = vrot.slane %v266, 2
  %v268 = vadd.f32 %v266, %v267
  %v269 = vrot.slane %v268, 1
  %v270 = vadd.f32 %v268, %v269
  %v271 = vsel %vm90, %v66, 0.0
  %v272 = vsel %vm90, %v67, 0.0
  %v273 = vadd.f32 %v271, %v272
  %v274 = vrot.slane %v273, 4
  %v275 = vadd.f32 %v273, %v274
  %v276 = vrot.slane %v275, 2
  %v277 = vadd.f32 %v275, %v276
  %v278 = vrot.slane %v277, 1
  %v279 = vadd.f32 %v277, %v278
  %v280 = vsel %vm90, %v68, 0.0
  %v281 = vsel %vm90, %v69, 0.0
  %v282 = vadd.f32 %v280, %v281
  %v283 = vrot.slane %v282, 4
  %v284 = vadd.f32 %v282, %v283
  %v285 = vrot.slane %v284, 2
  %v286 = vadd.f32 %v284, %v285
  %v287 = vrot.slane %v286, 1
  %v288 = vadd.f32 %v286, %v287
  %v289 = vsel %vm90, %v70, 0.0
  %v290 = vsel %vm90, %v71, 0.0
  %v291 = vadd.f32 %v289, %v290
  %v292 = vrot.slane %v291, 4
  %v293 = vadd.f32 %v291, %v292
  %v294 = vrot.slane %v293, 2
  %v295 = vadd.f32 %v293, %v294
  %v296 = vrot.slane %v295, 1
  %v297 = vadd.f32 %v295, %v296
  %v298 = vsel %vm90, %v72, 0.0
  %v299 = vsel %vm90, %v73, 0.0
  %v300 = vadd.f32 %v298, %v299
  %v301 = vrot.slane %v300, 4
  %v302 = vadd.f32 %v300, %v301
  %v303 = vrot.slane %v302, 2
  %v304 = vadd.f32 %v302, %v303
  %v305 = vrot.slane %v304, 1
  %v306 = vadd.f32 %v304, %v305
  %v307 = vsel %vm90, %v74, 0.0
  %v308 = vsel %vm90, %v75, 0.0
  %v309 = vadd.f32 %v307, %v308
  %v310 = vrot.slane %v309, 4
  %v311 = vadd.f32 %v309, %v310
  %v312 = vrot.slane %v311, 2
  %v313 = vadd.f32 %v311, %v312
  %v314 = vrot.slane %v313, 1
  %v315 = vadd.f32 %v313, %v314
  %v316 = vsel %vm90, %v76, 0.0
  %v317 = vsel %vm90, %v77, 0.0
  %v318 = vadd.f32 %v316, %v317
  %v319 = vrot.slane %v318, 4
  %v320 = vadd.f32 %v318, %v319
  %v321 = vrot.slane %v320, 2
  %v322 = vadd.f32 %v320, %v321
  %v323 = vrot.slane %v322, 1
  %v324 = vadd.f32 %v322, %v323
  %v325 = vsel %vm90, %v78, 0.0
  %v326 = vsel %vm90, %v79, 0.0
  %v327 = vadd.f32 %v325, %v326
  %v328 = vrot.slane %v327, 4
  %v329 = vadd.f32 %v327, %v328
  %v330 = vrot.slane %v329, 2
  %v331 = vadd.f32 %v329, %v330
  %v332 = vrot.slane %v331, 1
  %v333 = vadd.f32 %v331, %v332
  %v334 = vsel %vm90, %v80, 0.0
  %v335 = vsel %vm90, %v81, 0.0
  %v336 = vadd.f32 %v334, %v335
  %v337 = vrot.slane %v336, 4
  %v338 = vadd.f32 %v336, %v337
  %v339 = vrot.slane %v338, 2
  %v340 = vadd.f32 %v338, %v339
  %v341 = vrot.slane %v340, 1
  %v342 = vadd.f32 %v340, %v341
  %v343 = vsel %vm90, %v82, 0.0
  %v344 = vsel %vm90, %v83, 0.0
  %v345 = vadd.f32 %v343, %v344
  %v346 = vrot.slane %v345, 4
  %v347 = vadd.f32 %v345, %v346
  %v348 = vrot.slane %v347, 2
  %v349 = vadd.f32 %v347, %v348
  %v350 = vrot.slane %v349, 1
  %v351 = vadd.f32 %v349, %v350
  %v352 = vsel %vm90, %v84, 0.0
  %v353 = vsel %vm90, %v85, 0.0
  %v354 = vadd.f32 %v352, %v353
  %v355 = vrot.slane %v354, 4
  %v356 = vadd.f32 %v354, %v355
  %v357 = vrot.slane %v356, 2
  %v358 = vadd.f32 %v356, %v357
  %v359 = vrot.slane %v358, 1
  %v360 = vadd.f32 %v358, %v359
  %v361 = vsel %vm90, %v86, 0.0
  %v362 = vsel %vm90, %v87, 0.0
  %v363 = vadd.f32 %v361, %v362
  %v364 = vrot.slane %v363, 4
  %v365 = vadd.f32 %v363, %v364
  %v366 = vrot.slane %v365, 2
  %v367 = vadd.f32 %v365, %v366
  %v368 = vrot.slane %v367, 1
  %v369 = vadd.f32 %v367, %v368
  %v370 = vsel %vm90, %v88, 0.0
  %v371 = vsel %vm90, %v89, 0.0
  %v372 = vadd.f32 %v370, %v371
  %v373 = vrot.slane %v372, 4
  %v374 = vadd.f32 %v372, %v373
  %v375 = vrot.slane %v374, 2
  %v376 = vadd.f32 %v374, %v375
  %v377 = vrot.slane %v376, 1
  %v378 = vadd.f32 %v376, %v377
  %v379 = vrcp.pop 16.0
  %v380 = vmul.f32 %v99, %v379
  %v381 = vmul.f32 %v108, %v379
  %v382 = vmul.f32 %v117, %v379
  %v383 = vmul.f32 %v126, %v379
  %v384 = vmul.f32 %v135, %v379
  %v385 = vmul.f32 %v144, %v379
  %v386 = vmul.f32 %v153, %v379
  %v387 = vmul.f32 %v162, %v379
  %v388 = vmul.f32 %v171, %v379
  %v389 = vmul.f32 %v180, %v379
  %v390 = vmul.f32 %v189, %v379
  %v391 = vmul.f32 %v198, %v379
  %v392 = vmul.f32 %v207, %v379
  %v393 = vmul.f32 %v216, %v379
  %v394 = vmul.f32 %v225, %v379
  %v395 = vmul.f32 %v234, %v379
  %v396 = vmul.f32 %v243, %v379
  %v397 = vmul.f32 %v252, %v379
  %v398 = vmul.f32 %v261, %v379
  %v399 = vmul.f32 %v270, %v379
  %v400 = vmul.f32 %v279, %v379
  %v401 = vmul.f32 %v288, %v379
  %v402 = vmul.f32 %v297, %v379
  %v403 = vmul.f32 %v306, %v379
  %v404 = vmul.f32 %v315, %v379
  %v405 = vmul.f32 %v324, %v379
  %v406 = vmul.f32 %v333, %v379
  %v407 = vmul.f32 %v342, %v379
  %v408 = vmul.f32 %v351, %v379
  %v409 = vmul.f32 %v360, %v379
  %v410 = vmul.f32 %v369, %v379
  %v411 = vmul.f32 %v378, %v379
  %v412 = vadd.f32 %v91, %v100
  %v413 = vadd.f32 %v412, %v109
  %v414 = vadd.f32 %v413, %v118
  %v415 = vadd.f32 %v414, %v127
  %v416 = vadd.f32 %v415, %v136
  %v417 = vadd.f32 %v416, %v145
  %v418 = vadd.f32 %v417, %v154
  %v419 = vadd.f32 %v418, %v163
  %v420 = vadd.f32 %v419, %v172
  %v421 = vadd.f32 %v420, %v181
  %v422 = vadd.f32 %v421, %v190
  %v423 = vadd.f32 %v422, %v199
  %v424 = vadd.f32 %v423, %v208
  %v425 = vadd.f32 %v424, %v217
  %v426 = vadd.f32 %v425, %v226
  %v427 = vadd.f32 %v92, %v101
  %v428 = vadd.f32 %v427, %v110
  %v429 = vadd.f32 %v428, %v119
  %v430 = vadd.f32 %v429, %v128
  %v431 = vadd.f32 %v430, %v137
  %v432 = vadd.f32 %v431, %v146
  %v433 = vadd.f32 %v432, %v155
  %v434 = vadd.f32 %v433, %v164
  %v435 = vadd.f32 %v434, %v173
  %v436 = vadd.f32 %v435, %v182
  %v437 = vadd.f32 %v436, %v191
  %v438 = vadd.f32 %v437, %v200
  %v439 = vadd.f32 %v438, %v209
  %v440 = vadd.f32 %v439, %v218
  %v441 = vadd.f32 %v440, %v227
  %v442 = vadd.f32 %v235, %v244
  %v443 = vadd.f32 %v442, %v253
  %v444 = vadd.f32 %v443, %v262
  %v445 = vadd.f32 %v444, %v271
  %v446 = vadd.f32 %v445, %v280
  %v447 = vadd.f32 %v446, %v289
  %v448 = vadd.f32 %v447, %v298
  %v449 = vadd.f32 %v448, %v307
  %v450 = vadd.f32 %v449, %v316
  %v451 = vadd.f32 %v450, %v325
  %v452 = vadd.f32 %v451, %v334
  %v453 = vadd.f32 %v452, %v343
  %v454 = vadd.f32 %v453, %v352
  %v455 = vadd.f32 %v454, %v361
  %v456 = vadd.f32 %v455, %v370
  %v457 = vadd.f32 %v236, %v245
  %v458 = vadd.f32 %v457, %v254
  %v459 = vadd.f32 %v458, %v263
  %v460 = vadd.f32 %v459, %v272
  %v461 = vadd.f32 %v460, %v281
  %v462 = vadd.f32 %v461, %v290
  %v463 = vadd.f32 %v462, %v299
  %v464 = vadd.f32 %v463, %v308
  %v465 = vadd.f32 %v464, %v317
  %v466 = vadd.f32 %v465, %v326
  %v467 = vadd.f32 %v466, %v335
  %v468 = vadd.f32 %v467, %v344
  %v469 = vadd.f32 %v468, %v353
  %v470 = vadd.f32 %v469, %v362
  %v471 = vadd.f32 %v470, %v371
  %v472 = vmul.f32 %v426, %v379
  %v473 = vmul.f32 %v441, %v379
  %v474 = vmul.f32 %v456, %v379
  %v475 = vmul.f32 %v471, %v379
  %v476 = vld [vmem:[%s1] sm:$0xf]
  %v477 = vld [vmem:[%s2] sm:$0x1]
  %v479 = vlaneseq
  %v480 = vshrl.u32 %v479, 7
  %v481 = vsub.s32 0, %v480
  %v482 = vrot.slane %v477, %v481
  %vm516 = vcmask 1041409
  %v517 = vsel %vm516, %v381, %v380
  %vm518 = vcmask 1042434
  %v519 = vsel %vm518, %v382, %v517
  %vm520 = vcmask 1043459
  %v521 = vsel %vm520, %v383, %v519
  %vm522 = vcmask 1044484
  %v523 = vsel %vm522, %v384, %v521
  %vm524 = vcmask 1045509
  %v525 = vsel %vm524, %v385, %v523
  %vm526 = vcmask 1046534
  %v527 = vsel %vm526, %v386, %v525
  %vm528 = vcmask 1047559
  %v529 = vsel %vm528, %v387, %v527
  %v530 = vsel %vm516, %v389, %v388
  %v531 = vsel %vm518, %v390, %v530
  %v532 = vsel %vm520, %v391, %v531
  %v533 = vsel %vm522, %v392, %v532
  %v534 = vsel %vm524, %v393, %v533
  %v535 = vsel %vm526, %v394, %v534
  %v536 = vsel %vm528, %v395, %v535
  %v537 = vsel %vm516, %v397, %v396
  %v538 = vsel %vm518, %v398, %v537
  %v539 = vsel %vm520, %v399, %v538
  %v540 = vsel %vm522, %v400, %v539
  %v541 = vsel %vm524, %v401, %v540
  %v542 = vsel %vm526, %v402, %v541
  %v543 = vsel %vm528, %v403, %v542
  %v544 = vsel %vm516, %v405, %v404
  %v545 = vsel %vm518, %v406, %v544
  %v546 = vsel %vm520, %v407, %v545
  %v547 = vsel %vm522, %v408, %v546
  %v548 = vsel %vm524, %v409, %v547
  %v549 = vsel %vm526, %v410, %v548
  %v550 = vsel %vm528, %v411, %v549
  %v551 = vsel %vm90, %v529, 0
  %v553 = vsel %vm90, %v536, 0
  %v555 = vsel %vm90, %v543, 0
  %v557 = vsel %vm90, %v550, 0
  %vm559 = vcmask 1043456
  %v561 = vsel %vm559, %v476, 0
  %563 = vmatprep.subr.mxu0 0.0
  %564 = vmatpush1.msra.mxu0 %v561
  %565 = vmatprep.subr.mxu0 0.0
  %566 = vmatpush1.msra.mxu0 0.0
  %567 = vmatprep.subr.mxu0 0.0
  %568 = vmatpush1.msra.mxu0 0.0
  %569 = vmatprep.subr.mxu0 0.0
  %570 = vmatpush1.msra.mxu0 0.0
  %571 = vmatprep.subr.mxu0 0.0
  %572 = vmatpush1.msra.mxu0 0.0
  %573 = vmatprep.subr.mxu0 0.0
  %574 = vmatpush1.msra.mxu0 0.0
  %575 = vmatprep.subr.mxu0 0.0
  %576 = vmatpush1.msra.mxu0 0.0
  %577 = vmatprep.subr.mxu0 0.0
  %578 = vmatpush1.msra.mxu0 0.0
  %579 = vmatprep.subr.mxu0 0.0
  %580 = vmatpush1.msra.mxu0 0.0
  %581 = vmatprep.subr.mxu0 0.0
  %582 = vmatpush1.msra.mxu0 0.0
  %583 = vmatprep.subr.mxu0 0.0
  %584 = vmatpush1.msra.mxu0 0.0
  %585 = vmatprep.subr.mxu0 0.0
  %586 = vmatpush1.msra.mxu0 0.0
  %587 = vmatprep.subr.mxu0 0.0
  %588 = vmatpush1.msra.mxu0 0.0
  %589 = vmatprep.subr.mxu0 0.0
  %590 = vmatpush1.msra.mxu0 0.0
  %591 = vmatprep.subr.mxu0 0.0
  %592 = vmatpush1.msra.mxu0 0.0
  %593 = vmatprep.subr.mxu0 0.0
  %594 = vmatpush1.msra.mxu0 0.0
  %595 = vmatprep.subr.mxu0 0.0
  %596 = vmatpush1.msra.mxu0 0.0
  %597 = vmatprep.subr.mxu0 0.0
  %598 = vmatpush1.msra.mxu0 0.0
  %599 = vmatprep.subr.mxu0 0.0
  %600 = vmatpush1.msra.mxu0 0.0
  %601 = vmatprep.subr.mxu0 0.0
  %602 = vmatpush1.msra.mxu0 0.0
  %603 = vmatprep.subr.mxu0 0.0
  %604 = vmatpush1.msra.mxu0 0.0
  %605 = vmatprep.subr.mxu0 0.0
  %606 = vmatpush1.msra.mxu0 0.0
  %607 = vmatprep.subr.mxu0 0.0
  %608 = vmatpush1.msra.mxu0 0.0
  %609 = vmatprep.subr.mxu0 0.0
  %610 = vmatpush1.msra.mxu0 0.0
  %611 = vmatprep.subr.mxu0 0.0
  %612 = vmatpush1.msra.mxu0 0.0
  %613 = vmatprep.subr.mxu0 0.0
  %614 = vmatpush1.msra.mxu0 0.0
  %615 = vmatprep.subr.mxu0 0.0
  %616 = vmatpush1.msra.mxu0 0.0
  %617 = vmatprep.subr.mxu0 0.0
  %618 = vmatpush1.msra.mxu0 0.0
  %619 = vmatprep.subr.mxu0 0.0
  %620 = vmatpush1.msra.mxu0 0.0
  %621 = vmatprep.subr.mxu0 0.0
  %622 = vmatpush1.msra.mxu0 0.0
  %623 = vmatprep.subr.mxu0 0.0
  %624 = vmatpush1.msra.mxu0 0.0
  %625 = vmatprep.subr.mxu0 0.0
  %626 = vmatpush1.msra.mxu0 0.0
  %627 = vmatprep.mubr.f32.mxu0 0.0
  %628 = vmatmul.mubr.f32.gmra.mrb[0].mxu0 %v551
  %v629 = vpop.f32.mrb[0].mxu0
  %v630 = vadd.f32 %v482, %v629
  %v631 = vpop.f32.mrb[0].mxu0
  %632 = vmatprep.mubr.f32.mxu0 0.0
  %633 = vmatmul.mubr.f32.gmra.mrb[0].mxu0 %v553
  %v634 = vpop.f32.mrb[0].mxu0
  %v635 = vadd.f32 %v482, %v634
  %v636 = vpop.f32.mrb[0].mxu0
  %637 = vmatprep.mubr.f32.mxu0 0.0
  %638 = vmatmul.mubr.f32.gmra.mrb[0].mxu0 %v555
  %v639 = vpop.f32.mrb[0].mxu0
  %v640 = vadd.f32 %v482, %v639
  %v641 = vpop.f32.mrb[0].mxu0
  %642 = vmatprep.mubr.f32.mxu0 0.0
  %643 = vmatmul.mubr.f32.gmra.mrb[0].mxu0 %v557
  %v644 = vpop.f32.mrb[0].mxu0
  %v645 = vadd.f32 %v482, %v644
  %v646 = vpop.f32.mrb[0].mxu0
  %647 = vdwg.mxu0
  %v649 = vsel %vm90, %v472, 0
  %v652 = vsel %vm90, %v473, 0
  %v655 = vsel %vm90, %v474, 0
  %v658 = vsel %vm90, %v475, 0
  %660 = vmatprep.subr.mxu0 0.0
  %661 = vmatpush1.msra.mxu0 %v561
  %662 = vmatprep.subr.mxu0 0.0
  %663 = vmatpush1.msra.mxu0 0.0
  %664 = vmatprep.subr.mxu0 0.0
  %665 = vmatpush1.msra.mxu0 0.0
  %666 = vmatprep.subr.mxu0 0.0
  %667 = vmatpush1.msra.mxu0 0.0
  %668 = vmatprep.subr.mxu0 0.0
  %669 = vmatpush1.msra.mxu0 0.0
  %670 = vmatprep.subr.mxu0 0.0
  %671 = vmatpush1.msra.mxu0 0.0
  %672 = vmatprep.subr.mxu0 0.0
  %673 = vmatpush1.msra.mxu0 0.0
  %674 = vmatprep.subr.mxu0 0.0
  %675 = vmatpush1.msra.mxu0 0.0
  %676 = vmatprep.subr.mxu0 0.0
  %677 = vmatpush1.msra.mxu0 0.0
  %678 = vmatprep.subr.mxu0 0.0
  %679 = vmatpush1.msra.mxu0 0.0
  %680 = vmatprep.subr.mxu0 0.0
  %681 = vmatpush1.msra.mxu0 0.0
  %682 = vmatprep.subr.mxu0 0.0
  %683 = vmatpush1.msra.mxu0 0.0
  %684 = vmatprep.subr.mxu0 0.0
  %685 = vmatpush1.msra.mxu0 0.0
  %686 = vmatprep.subr.mxu0 0.0
  %687 = vmatpush1.msra.mxu0 0.0
  %688 = vmatprep.subr.mxu0 0.0
  %689 = vmatpush1.msra.mxu0 0.0
  %690 = vmatprep.subr.mxu0 0.0
  %691 = vmatpush1.msra.mxu0 0.0
  %692 = vmatprep.subr.mxu0 0.0
  %693 = vmatpush1.msra.mxu0 0.0
  %694 = vmatprep.subr.mxu0 0.0
  %695 = vmatpush1.msra.mxu0 0.0
  %696 = vmatprep.subr.mxu0 0.0
  %697 = vmatpush1.msra.mxu0 0.0
  %698 = vmatprep.subr.mxu0 0.0
  %699 = vmatpush1.msra.mxu0 0.0
  %700 = vmatprep.subr.mxu0 0.0
  %701 = vmatpush1.msra.mxu0 0.0
  %702 = vmatprep.subr.mxu0 0.0
  %703 = vmatpush1.msra.mxu0 0.0
  %704 = vmatprep.subr.mxu0 0.0
  %705 = vmatpush1.msra.mxu0 0.0
  %706 = vmatprep.subr.mxu0 0.0
  %707 = vmatpush1.msra.mxu0 0.0
  %708 = vmatprep.subr.mxu0 0.0
  %709 = vmatpush1.msra.mxu0 0.0
  %710 = vmatprep.subr.mxu0 0.0
  %711 = vmatpush1.msra.mxu0 0.0
  %712 = vmatprep.subr.mxu0 0.0
  %713 = vmatpush1.msra.mxu0 0.0
  %714 = vmatprep.subr.mxu0 0.0
  %715 = vmatpush1.msra.mxu0 0.0
  %716 = vmatprep.subr.mxu0 0.0
  %717 = vmatpush1.msra.mxu0 0.0
  %718 = vmatprep.subr.mxu0 0.0
  %719 = vmatpush1.msra.mxu0 0.0
  %720 = vmatprep.subr.mxu0 0.0
  %721 = vmatpush1.msra.mxu0 0.0
  %722 = vmatprep.subr.mxu0 0.0
  %723 = vmatpush1.msra.mxu0 0.0
  %724 = vmatprep.mubr.f32.mxu0 0.0
  %725 = vmatmul.mubr.f32.gmra.mrb[0].mxu0 %v649
  %v726 = vpop.f32.mrb[0].mxu0
  %v727 = vadd.f32 %v482, %v726
  %v728 = vpop.f32.mrb[0].mxu0
  %729 = vmatprep.mubr.f32.mxu0 0.0
  %730 = vmatmul.mubr.f32.gmra.mrb[0].mxu0 %v652
  %v731 = vpop.f32.mrb[0].mxu0
  %v732 = vadd.f32 %v482, %v731
  %v733 = vpop.f32.mrb[0].mxu0
  %734 = vmatprep.mubr.f32.mxu0 0.0
  %735 = vmatmul.mubr.f32.gmra.mrb[0].mxu0 %v655
  %v736 = vpop.f32.mrb[0].mxu0
  %v737 = vadd.f32 %v482, %v736
  %v738 = vpop.f32.mrb[0].mxu0
  %739 = vmatprep.mubr.f32.mxu0 0.0
  %740 = vmatmul.mubr.f32.gmra.mrb[0].mxu0 %v658
  %v741 = vpop.f32.mrb[0].mxu0
  %v742 = vadd.f32 %v482, %v741
  %v743 = vpop.f32.mrb[0].mxu0
  %744 = vdwg.mxu0
  %v745 = vadd.f32 %v630, 3.0
  %v746 = vadd.f32 %v635, 3.0
  %v747 = vadd.f32 %v640, 3.0
  %v748 = vadd.f32 %v645, 3.0
  %v749 = vmax.f32 %v745, 0.0
  %v750 = vmax.f32 %v746, 0.0
  %v751 = vmax.f32 %v747, 0.0
  %v752 = vmax.f32 %v748, 0.0
  %v753 = vmin.f32 %v749, 6.0
  %v754 = vmin.f32 %v750, 6.0
  %v755 = vmin.f32 %v751, 6.0
  %v756 = vmin.f32 %v752, 6.0
  %v757 = vmul.f32 %v630, %v753
  %v758 = vmul.f32 %v635, %v754
  %v759 = vmul.f32 %v640, %v755
  %v760 = vmul.f32 %v645, %v756
  %v761 = vmul.f32 %v757, 0.16666667
  %v762 = vmul.f32 %v758, 0.16666667
  %v763 = vmul.f32 %v759, 0.16666667
  %v764 = vmul.f32 %v760, 0.16666667
  %v765 = vadd.f32 %v727, 3.0
  %v766 = vadd.f32 %v732, 3.0
  %v767 = vadd.f32 %v737, 3.0
  %v768 = vadd.f32 %v742, 3.0
  %v769 = vmax.f32 %v765, 0.0
  %v770 = vmax.f32 %v766, 0.0
  %v771 = vmax.f32 %v767, 0.0
  %v772 = vmax.f32 %v768, 0.0
  %v773 = vmin.f32 %v769, 6.0
  %v774 = vmin.f32 %v770, 6.0
  %v775 = vmin.f32 %v771, 6.0
  %v776 = vmin.f32 %v772, 6.0
  %v777 = vmul.f32 %v727, %v773
  %v778 = vmul.f32 %v732, %v774
  %v779 = vmul.f32 %v737, %v775
  %v780 = vmul.f32 %v742, %v776
  %v781 = vmul.f32 %v777, 0.16666667
  %v782 = vmul.f32 %v778, 0.16666667
  %v783 = vmul.f32 %v779, 0.16666667
  %v784 = vmul.f32 %v780, 0.16666667
  %v785 = vld [vmem:[%s3] sm:$0xff]
  %v786 = vld [vmem:[%s4] sm:$0x1]
  %v788 = vlaneseq
  %v789 = vshrl.u32 %v788, 7
  %v790 = vsub.s32 0, %v789
  %v791 = vrot.slane %v786, %v790
  %vm793 = vcmask 64512
  %v795 = vsel %vm793, %v761, 0
  %v798 = vsel %vm793, %v762, 0
  %v801 = vsel %vm793, %v763, 0
  %v804 = vsel %vm793, %v764, 0
  %806 = vmatprep.subr.mxu0 0.0
  %807 = vmatpush1.msra.mxu0 %v785
  %808 = vmatprep.subr.mxu0 0.0
  %809 = vmatpush1.msra.mxu0 0.0
  %810 = vmatprep.subr.mxu0 0.0
  %811 = vmatpush1.msra.mxu0 0.0
  %812 = vmatprep.subr.mxu0 0.0
  %813 = vmatpush1.msra.mxu0 0.0
  %814 = vmatprep.subr.mxu0 0.0
  %815 = vmatpush1.msra.mxu0 0.0
  %816 = vmatprep.subr.mxu0 0.0
  %817 = vmatpush1.msra.mxu0 0.0
  %818 = vmatprep.subr.mxu0 0.0
  %819 = vmatpush1.msra.mxu0 0.0
  %820 = vmatprep.subr.mxu0 0.0
  %821 = vmatpush1.msra.mxu0 0.0
  %822 = vmatprep.subr.mxu0 0.0
  %823 = vmatpush1.msra.mxu0 0.0
  %824 = vmatprep.subr.mxu0 0.0
  %825 = vmatpush1.msra.mxu0 0.0
  %826 = vmatprep.subr.mxu0 0.0
  %827 = vmatpush1.msra.mxu0 0.0
  %828 = vmatprep.subr.mxu0 0.0
  %829 = vmatpush1.msra.mxu0 0.0
  %830 = vmatprep.subr.mxu0 0.0
  %831 = vmatpush1.msra.mxu0 0.0
  %832 = vmatprep.subr.mxu0 0.0
  %833 = vmatpush1.msra.mxu0 0.0
  %834 = vmatprep.subr.mxu0 0.0
  %835 = vmatpush1.msra.mxu0 0.0
  %836 = vmatprep.subr.mxu0 0.0
  %837 = vmatpush1.msra.mxu0 0.0
  %838 = vmatprep.subr.mxu0 0.0
  %839 = vmatpush1.msra.mxu0 0.0
  %840 = vmatprep.subr.mxu0 0.0
  %841 = vmatpush1.msra.mxu0 0.0
  %842 = vmatprep.subr.mxu0 0.0
  %843 = vmatpush1.msra.mxu0 0.0
  %844 = vmatprep.subr.mxu0 0.0
  %845 = vmatpush1.msra.mxu0 0.0
  %846 = vmatprep.subr.mxu0 0.0
  %847 = vmatpush1.msra.mxu0 0.0
  %848 = vmatprep.subr.mxu0 0.0
  %849 = vmatpush1.msra.mxu0 0.0
  %850 = vmatprep.subr.mxu0 0.0
  %851 = vmatpush1.msra.mxu0 0.0
  %852 = vmatprep.subr.mxu0 0.0
  %853 = vmatpush1.msra.mxu0 0.0
  %854 = vmatprep.subr.mxu0 0.0
  %855 = vmatpush1.msra.mxu0 0.0
  %856 = vmatprep.subr.mxu0 0.0
  %857 = vmatpush1.msra.mxu0 0.0
  %858 = vmatprep.subr.mxu0 0.0
  %859 = vmatpush1.msra.mxu0 0.0
  %860 = vmatprep.subr.mxu0 0.0
  %861 = vmatpush1.msra.mxu0 0.0
  %862 = vmatprep.subr.mxu0 0.0
  %863 = vmatpush1.msra.mxu0 0.0
  %864 = vmatprep.subr.mxu0 0.0
  %865 = vmatpush1.msra.mxu0 0.0
  %866 = vmatprep.subr.mxu0 0.0
  %867 = vmatpush1.msra.mxu0 0.0
  %868 = vmatprep.subr.mxu0 0.0
  %869 = vmatpush1.msra.mxu0 0.0
  %870 = vmatprep.mubr.f32.mxu0 0.0
  %871 = vmatmul.mubr.f32.gmra.mrb[0].mxu0 %v795
  %v872 = vpop.f32.mrb[0].mxu0
  %v873 = vadd.f32 %v791, %v872
  %v874 = vpop.f32.mrb[0].mxu0
  %875 = vmatprep.mubr.f32.mxu0 0.0
  %876 = vmatmul.mubr.f32.gmra.mrb[0].mxu0 %v798
  %v877 = vpop.f32.mrb[0].mxu0
  %v878 = vadd.f32 %v791, %v877
  %v879 = vpop.f32.mrb[0].mxu0
  %880 = vmatprep.mubr.f32.mxu0 0.0
  %881 = vmatmul.mubr.f32.gmra.mrb[0].mxu0 %v801
  %v882 = vpop.f32.mrb[0].mxu0
  %v883 = vadd.f32 %v791, %v882
  %v884 = vpop.f32.mrb[0].mxu0
  %885 = vmatprep.mubr.f32.mxu0 0.0
  %886 = vmatmul.mubr.f32.gmra.mrb[0].mxu0 %v804
  %v887 = vpop.f32.mrb[0].mxu0
  %v888 = vadd.f32 %v791, %v887
  %v889 = vpop.f32.mrb[0].mxu0
  %890 = vdwg.mxu0
  %v891 = vxor.u32 %v873, 2147483648
  %v892 = vxor.u32 %v878, 2147483648
  %v893 = vxor.u32 %v883, 2147483648
  %v894 = vxor.u32 %v888, 2147483648
  %v895 = vmul.f32 %v891, 1.442695
  %v896 = vpow.pop %v895
  %v897 = vmul.f32 %v892, 1.442695
  %v898 = vpow.pop %v897
  %v899 = vmul.f32 %v893, 1.442695
  %v900 = vpow.pop %v899
  %v901 = vmul.f32 %v894, 1.442695
  %v902 = vpow.pop %v901
  %v903 = vadd.f32 %v896, 1.0
  %v904 = vadd.f32 %v898, 1.0
  %v905 = vadd.f32 %v900, 1.0
  %v906 = vadd.f32 %v902, 1.0
  %v907 = vrcp.pop %v903
  %v908 = vmul.f32 1.0, %v907
  %v909 = vrcp.pop %v904
  %v910 = vmul.f32 1.0, %v909
  %v911 = vrcp.pop %v905
  %v912 = vmul.f32 1.0, %v911
  %v913 = vrcp.pop %v906
  %v914 = vmul.f32 1.0, %v913
  %v915 = vld [vmem:[%s5] sm:$0xff]
  %v916 = vld [vmem:[%s6] sm:$0x1]
  %v918 = vlaneseq
  %v919 = vshrl.u32 %v918, 7
  %v920 = vsub.s32 0, %v919
  %v921 = vrot.slane %v916, %v920
  %v924 = vsel %vm793, %v781, 0
  %v927 = vsel %vm793, %v782, 0
  %v930 = vsel %vm793, %v783, 0
  %v933 = vsel %vm793, %v784, 0
  %935 = vmatprep.subr.mxu0 0.0
  %936 = vmatpush1.msra.mxu0 %v915
  %937 = vmatprep.subr.mxu0 0.0
  %938 = vmatpush1.msra.mxu0 0.0
  %939 = vmatprep.subr.mxu0 0.0
  %940 = vmatpush1.msra.mxu0 0.0
  %941 = vmatprep.subr.mxu0 0.0
  %942 = vmatpush1.msra.mxu0 0.0
  %943 = vmatprep.subr.mxu0 0.0
  %944 = vmatpush1.msra.mxu0 0.0
  %945 = vmatprep.subr.mxu0 0.0
  %946 = vmatpush1.msra.mxu0 0.0
  %947 = vmatprep.subr.mxu0 0.0
  %948 = vmatpush1.msra.mxu0 0.0
  %949 = vmatprep.subr.mxu0 0.0
  %950 = vmatpush1.msra.mxu0 0.0
  %951 = vmatprep.subr.mxu0 0.0
  %952 = vmatpush1.msra.mxu0 0.0
  %953 = vmatprep.subr.mxu0 0.0
  %954 = vmatpush1.msra.mxu0 0.0
  %955 = vmatprep.subr.mxu0 0.0
  %956 = vmatpush1.msra.mxu0 0.0
  %957 = vmatprep.subr.mxu0 0.0
  %958 = vmatpush1.msra.mxu0 0.0
  %959 = vmatprep.subr.mxu0 0.0
  %960 = vmatpush1.msra.mxu0 0.0
  %961 = vmatprep.subr.mxu0 0.0
  %962 = vmatpush1.msra.mxu0 0.0
  %963 = vmatprep.subr.mxu0 0.0
  %964 = vmatpush1.msra.mxu0 0.0
  %965 = vmatprep.subr.mxu0 0.0
  %966 = vmatpush1.msra.mxu0 0.0
  %967 = vmatprep.subr.mxu0 0.0
  %968 = vmatpush1.msra.mxu0 0.0
  %969 = vmatprep.subr.mxu0 0.0
  %970 = vmatpush1.msra.mxu0 0.0
  %971 = vmatprep.subr.mxu0 0.0
  %972 = vmatpush1.msra.mxu0 0.0
  %973 = vmatprep.subr.mxu0 0.0
  %974 = vmatpush1.msra.mxu0 0.0
  %975 = vmatprep.subr.mxu0 0.0
  %976 = vmatpush1.msra.mxu0 0.0
  %977 = vmatprep.subr.mxu0 0.0
  %978 = vmatpush1.msra.mxu0 0.0
  %979 = vmatprep.subr.mxu0 0.0
  %980 = vmatpush1.msra.mxu0 0.0
  %981 = vmatprep.subr.mxu0 0.0
  %982 = vmatpush1.msra.mxu0 0.0
  %983 = vmatprep.subr.mxu0 0.0
  %984 = vmatpush1.msra.mxu0 0.0
  %985 = vmatprep.subr.mxu0 0.0
  %986 = vmatpush1.msra.mxu0 0.0
  %987 = vmatprep.subr.mxu0 0.0
  %988 = vmatpush1.msra.mxu0 0.0
  %989 = vmatprep.subr.mxu0 0.0
  %990 = vmatpush1.msra.mxu0 0.0
  %991 = vmatprep.subr.mxu0 0.0
  %992 = vmatpush1.msra.mxu0 0.0
  %993 = vmatprep.subr.mxu0 0.0
  %994 = vmatpush1.msra.mxu0 0.0
  %995 = vmatprep.subr.mxu0 0.0
  %996 = vmatpush1.msra.mxu0 0.0
  %997 = vmatprep.subr.mxu0 0.0
  %998 = vmatpush1.msra.mxu0 0.0
  %999 = vmatprep.mubr.f32.mxu0 0.0
  %1000 = vmatmul.mubr.f32.gmra.mrb[0].mxu0 %v924
  %v1001 = vpop.f32.mrb[0].mxu0
  %v1002 = vadd.f32 %v921, %v1001
  %v1003 = vpop.f32.mrb[0].mxu0
  %1004 = vmatprep.mubr.f32.mxu0 0.0
  %1005 = vmatmul.mubr.f32.gmra.mrb[0].mxu0 %v927
  %v1006 = vpop.f32.mrb[0].mxu0
  %v1007 = vadd.f32 %v921, %v1006
  %v1008 = vpop.f32.mrb[0].mxu0
  %1009 = vmatprep.mubr.f32.mxu0 0.0
  %1010 = vmatmul.mubr.f32.gmra.mrb[0].mxu0 %v930
  %v1011 = vpop.f32.mrb[0].mxu0
  %v1012 = vadd.f32 %v921, %v1011
  %v1013 = vpop.f32.mrb[0].mxu0
  %1014 = vmatprep.mubr.f32.mxu0 0.0
  %1015 = vmatmul.mubr.f32.gmra.mrb[0].mxu0 %v933
  %v1016 = vpop.f32.mrb[0].mxu0
  %v1017 = vadd.f32 %v921, %v1016
  %v1018 = vpop.f32.mrb[0].mxu0
  %1019 = vdwg.mxu0
  %v1020 = vxor.u32 %v1002, 2147483648
  %v1021 = vxor.u32 %v1007, 2147483648
  %v1022 = vxor.u32 %v1012, 2147483648
  %v1023 = vxor.u32 %v1017, 2147483648
  %v1024 = vmul.f32 %v1020, 1.442695
  %v1025 = vpow.pop %v1024
  %v1026 = vmul.f32 %v1021, 1.442695
  %v1027 = vpow.pop %v1026
  %v1028 = vmul.f32 %v1022, 1.442695
  %v1029 = vpow.pop %v1028
  %v1030 = vmul.f32 %v1023, 1.442695
  %v1031 = vpow.pop %v1030
  %v1032 = vadd.f32 %v1025, 1.0
  %v1033 = vadd.f32 %v1027, 1.0
  %v1034 = vadd.f32 %v1029, 1.0
  %v1035 = vadd.f32 %v1031, 1.0
  %v1036 = vrcp.pop %v1032
  %v1037 = vmul.f32 1.0, %v1036
  %v1038 = vrcp.pop %v1033
  %v1039 = vmul.f32 1.0, %v1038
  %v1040 = vrcp.pop %v1034
  %v1041 = vmul.f32 1.0, %v1040
  %v1042 = vrcp.pop %v1035
  %v1043 = vmul.f32 1.0, %v1042
  %v1048 = vcombine.high %v908, %v908
  %v1050 = vunpack.c.l.s4 1966171168
  %v1051 = vunpack.c.0.s8 %v1050
  %v1052 = vlaneseq
  %v1053 = vshrl.u32 %v1052, 7
  %v1054 = vsub.s32 %v1051, %v1053
  %v1055 = vrot.slane %v908, %v1054
  %v1057 = vunpack.c.l.s4 1966171168
  %v1058 = vunpack.c.0.s8 %v1057
  %v1059 = vlaneseq
  %v1060 = vshrl.u32 %v1059, 7
  %v1061 = vsub.s32 %v1058, %v1060
  %v1062 = vrot.slane %v1048, %v1061
  %v1063 = vcombine.high %v1055, %v1055
  %v1064 = vcombine.high %v1062, %v1062
  %v1066 = vunpack.c.l.s4 1966171168
  %v1067 = vunpack.c.0.s8 %v1066
  %v1068 = vlaneseq
  %v1069 = vshrl.u32 %v1068, 7
  %v1070 = vsub.s32 %v1067, %v1069
  %v1071 = vrot.slane %v1055, %v1070
  %v1073 = vunpack.c.l.s4 1966171168
  %v1074 = vunpack.c.0.s8 %v1073
  %v1075 = vlaneseq
  %v1076 = vshrl.u32 %v1075, 7
  %v1077 = vsub.s32 %v1074, %v1076
  %v1078 = vrot.slane %v1062, %v1077
  %v1080 = vunpack.c.l.s4 1966171168
  %v1081 = vunpack.c.0.s8 %v1080
  %v1082 = vlaneseq
  %v1083 = vshrl.u32 %v1082, 7
  %v1084 = vsub.s32 %v1081, %v1083
  %v1085 = vrot.slane %v1063, %v1084
  %v1087 = vunpack.c.l.s4 1966171168
  %v1088 = vunpack.c.0.s8 %v1087
  %v1089 = vlaneseq
  %v1090 = vshrl.u32 %v1089, 7
  %v1091 = vsub.s32 %v1088, %v1090
  %v1092 = vrot.slane %v1064, %v1091
  %v1093 = vcombine.high %v1071, %v1071
  %v1094 = vcombine.high %v1078, %v1078
  %v1095 = vcombine.high %v1085, %v1085
  %v1096 = vcombine.high %v1092, %v1092
  %v1097 = vcombine.high %v910, %v910
  %v1099 = vunpack.c.l.s4 1966171168
  %v1100 = vunpack.c.0.s8 %v1099
  %v1101 = vlaneseq
  %v1102 = vshrl.u32 %v1101, 7
  %v1103 = vsub.s32 %v1100, %v1102
  %v1104 = vrot.slane %v910, %v1103
  %v1106 = vunpack.c.l.s4 1966171168
  %v1107 = vunpack.c.0.s8 %v1106
  %v1108 = vlaneseq
  %v1109 = vshrl.u32 %v1108, 7
  %v1110 = vsub.s32 %v1107, %v1109
  %v1111 = vrot.slane %v1097, %v1110
  %v1112 = vcombine.high %v1104, %v1104
  %v1113 = vcombine.high %v1111, %v1111
  %v1115 = vunpack.c.l.s4 1966171168
  %v1116 = vunpack.c.0.s8 %v1115
  %v1117 = vlaneseq
  %v1118 = vshrl.u32 %v1117, 7
  %v1119 = vsub.s32 %v1116, %v1118
  %v1120 = vrot.slane %v1104, %v1119
  %v1122 = vunpack.c.l.s4 1966171168
  %v1123 = vunpack.c.0.s8 %v1122
  %v1124 = vlaneseq
  %v1125 = vshrl.u32 %v1124, 7
  %v1126 = vsub.s32 %v1123, %v1125
  %v1127 = vrot.slane %v1111, %v1126
  %v1129 = vunpack.c.l.s4 1966171168
  %v1130 = vunpack.c.0.s8 %v1129
  %v1131 = vlaneseq
  %v1132 = vshrl.u32 %v1131, 7
  %v1133 = vsub.s32 %v1130, %v1132
  %v1134 = vrot.slane %v1112, %v1133
  %v1136 = vunpack.c.l.s4 1966171168
  %v1137 = vunpack.c.0.s8 %v1136
  %v1138 = vlaneseq
  %v1139 = vshrl.u32 %v1138, 7
  %v1140 = vsub.s32 %v1137, %v1139
  %v1141 = vrot.slane %v1113, %v1140
  %v1142 = vcombine.high %v1120, %v1120
  %v1143 = vcombine.high %v1127, %v1127
  %v1144 = vcombine.high %v1134, %v1134
  %v1145 = vcombine.high %v1141, %v1141
  %v1146 = vcombine.high %v912, %v912
  %v1148 = vunpack.c.l.s4 1966171168
  %v1149 = vunpack.c.0.s8 %v1148
  %v1150 = vlaneseq
  %v1151 = vshrl.u32 %v1150, 7
  %v1152 = vsub.s32 %v1149, %v1151
  %v1153 = vrot.slane %v912, %v1152
  %v1155 = vunpack.c.l.s4 1966171168
  %v1156 = vunpack.c.0.s8 %v1155
  %v1157 = vlaneseq
  %v1158 = vshrl.u32 %v1157, 7
  %v1159 = vsub.s32 %v1156, %v1158
  %v1160 = vrot.slane %v1146, %v1159
  %v1161 = vcombine.high %v1153, %v1153
  %v1162 = vcombine.high %v1160, %v1160
  %v1164 = vunpack.c.l.s4 1966171168
  %v1165 = vunpack.c.0.s8 %v1164
  %v1166 = vlaneseq
  %v1167 = vshrl.u32 %v1166, 7
  %v1168 = vsub.s32 %v1165, %v1167
  %v1169 = vrot.slane %v1153, %v1168
  %v1171 = vunpack.c.l.s4 1966171168
  %v1172 = vunpack.c.0.s8 %v1171
  %v1173 = vlaneseq
  %v1174 = vshrl.u32 %v1173, 7
  %v1175 = vsub.s32 %v1172, %v1174
  %v1176 = vrot.slane %v1160, %v1175
  %v1178 = vunpack.c.l.s4 1966171168
  %v1179 = vunpack.c.0.s8 %v1178
  %v1180 = vlaneseq
  %v1181 = vshrl.u32 %v1180, 7
  %v1182 = vsub.s32 %v1179, %v1181
  %v1183 = vrot.slane %v1161, %v1182
  %v1185 = vunpack.c.l.s4 1966171168
  %v1186 = vunpack.c.0.s8 %v1185
  %v1187 = vlaneseq
  %v1188 = vshrl.u32 %v1187, 7
  %v1189 = vsub.s32 %v1186, %v1188
  %v1190 = vrot.slane %v1162, %v1189
  %v1191 = vcombine.high %v1169, %v1169
  %v1192 = vcombine.high %v1176, %v1176
  %v1193 = vcombine.high %v1183, %v1183
  %v1194 = vcombine.high %v1190, %v1190
  %v1195 = vcombine.high %v914, %v914
  %v1197 = vunpack.c.l.s4 1966171168
  %v1198 = vunpack.c.0.s8 %v1197
  %v1199 = vlaneseq
  %v1200 = vshrl.u32 %v1199, 7
  %v1201 = vsub.s32 %v1198, %v1200
  %v1202 = vrot.slane %v914, %v1201
  %v1204 = vunpack.c.l.s4 1966171168
  %v1205 = vunpack.c.0.s8 %v1204
  %v1206 = vlaneseq
  %v1207 = vshrl.u32 %v1206, 7
  %v1208 = vsub.s32 %v1205, %v1207
  %v1209 = vrot.slane %v1195, %v1208
  %v1210 = vcombine.high %v1202, %v1202
  %v1211 = vcombine.high %v1209, %v1209
  %v1213 = vunpack.c.l.s4 1966171168
  %v1214 = vunpack.c.0.s8 %v1213
  %v1215 = vlaneseq
  %v1216 = vshrl.u32 %v1215, 7
  %v1217 = vsub.s32 %v1214, %v1216
  %v1218 = vrot.slane %v1202, %v1217
  %v1220 = vunpack.c.l.s4 1966171168
  %v1221 = vunpack.c.0.s8 %v1220
  %v1222 = vlaneseq
  %v1223 = vshrl.u32 %v1222, 7
  %v1224 = vsub.s32 %v1221, %v1223
  %v1225 = vrot.slane %v1209, %v1224
  %v1227 = vunpack.c.l.s4 1966171168
  %v1228 = vunpack.c.0.s8 %v1227
  %v1229 = vlaneseq
  %v1230 = vshrl.u32 %v1229, 7
  %v1231 = vsub.s32 %v1228, %v1230
  %v1232 = vrot.slane %v1210, %v1231
  %v1234 = vunpack.c.l.s4 1966171168
  %v1235 = vunpack.c.0.s8 %v1234
  %v1236 = vlaneseq
  %v1237 = vshrl.u32 %v1236, 7
  %v1238 = vsub.s32 %v1235, %v1237
  %v1239 = vrot.slane %v1211, %v1238
  %v1240 = vcombine.high %v1218, %v1218
  %v1241 = vcombine.high %v1225, %v1225
  %v1242 = vcombine.high %v1232, %v1232
  %v1243 = vcombine.high %v1239, %v1239
  %v1244 = vlaneseq
  %v1245 = vshrl.u32 %v1244, 7
  %v1246 = vsub.s32 0, %v1245
  %v1247 = vrot.slane %v1071, %v1246
  %v1248 = vlaneseq
  %v1249 = vshrl.u32 %v1248, 7
  %v1250 = vsub.s32 0, %v1249
  %v1251 = vrot.slane %v1085, %v1250
  %v1252 = vlaneseq
  %v1253 = vshrl.u32 %v1252, 7
  %v1254 = vsub.s32 0, %v1253
  %v1255 = vrot.slane %v1093, %v1254
  %v1256 = vlaneseq
  %v1257 = vshrl.u32 %v1256, 7
  %v1258 = vsub.s32 0, %v1257
  %v1259 = vrot.slane %v1095, %v1258
  %v1260 = vlaneseq
  %v1261 = vshrl.u32 %v1260, 7
  %v1262 = vsub.s32 0, %v1261
  %v1263 = vrot.slane %v1078, %v1262
  %v1264 = vlaneseq
  %v1265 = vshrl.u32 %v1264, 7
  %v1266 = vsub.s32 0, %v1265
  %v1267 = vrot.slane %v1092, %v1266
  %v1268 = vlaneseq
  %v1269 = vshrl.u32 %v1268, 7
  %v1270 = vsub.s32 0, %v1269
  %v1271 = vrot.slane %v1094, %v1270
  %v1272 = vlaneseq
  %v1273 = vshrl.u32 %v1272, 7
  %v1274 = vsub.s32 0, %v1273
  %v1275 = vrot.slane %v1096, %v1274
  %v1276 = vlaneseq
  %v1277 = vshrl.u32 %v1276, 7
  %v1278 = vsub.s32 0, %v1277
  %v1279 = vrot.slane %v1120, %v1278
  %v1280 = vlaneseq
  %v1281 = vshrl.u32 %v1280, 7
  %v1282 = vsub.s32 0, %v1281
  %v1283 = vrot.slane %v1134, %v1282
  %v1284 = vlaneseq
  %v1285 = vshrl.u32 %v1284, 7
  %v1286 = vsub.s32 0, %v1285
  %v1287 = vrot.slane %v1142, %v1286
  %v1288 = vlaneseq
  %v1289 = vshrl.u32 %v1288, 7
  %v1290 = vsub.s32 0, %v1289
  %v1291 = vrot.slane %v1144, %v1290
  %v1292 = vlaneseq
  %v1293 = vshrl.u32 %v1292, 7
  %v1294 = vsub.s32 0, %v1293
  %v1295 = vrot.slane %v1127, %v1294
  %v1296 = vlaneseq
  %v1297 = vshrl.u32 %v1296, 7
  %v1298 = vsub.s32 0, %v1297
  %v1299 = vrot.slane %v1141, %v1298
  %v1300 = vlaneseq
  %v1301 = vshrl.u32 %v1300, 7
  %v1302 = vsub.s32 0, %v1301
  %v1303 = vrot.slane %v1143, %v1302
  %v1304 = vlaneseq
  %v1305 = vshrl.u32 %v1304, 7
  %v1306 = vsub.s32 0, %v1305
  %v1307 = vrot.slane %v1145, %v1306
  %v1308 = vlaneseq
  %v1309 = vshrl.u32 %v1308, 7
  %v1310 = vsub.s32 0, %v1309
  %v1311 = vrot.slane %v1169, %v1310
  %v1312 = vlaneseq
  %v1313 = vshrl.u32 %v1312, 7
  %v1314 = vsub.s32 0, %v1313
  %v1315 = vrot.slane %v1183, %v1314
  %v1316 = vlaneseq
  %v1317 = vshrl.u32 %v1316, 7
  %v1318 = vsub.s32 0, %v1317
  %v1319 = vrot.slane %v1191, %v1318
  %v1320 = vlaneseq
  %v1321 = vshrl.u32 %v1320, 7
  %v1322 = vsub.s32 0, %v1321
  %v1323 = vrot.slane %v1193, %v1322
  %v1324 = vlaneseq
  %v1325 = vshrl.u32 %v1324, 7
  %v1326 = vsub.s32 0, %v1325
  %v1327 = vrot.slane %v1176, %v1326
  %v1328 = vlaneseq
  %v1329 = vshrl.u32 %v1328, 7
  %v1330 = vsub.s32 0, %v1329
  %v1331 = vrot.slane %v1190, %v1330
  %v1332 = vlaneseq
  %v1333 = vshrl.u32 %v1332, 7
  %v1334 = vsub.s32 0, %v1333
  %v1335 = vrot.slane %v1192, %v1334
  %v1336 = vlaneseq
  %v1337 = vshrl.u32 %v1336, 7
  %v1338 = vsub.s32 0, %v1337
  %v1339 = vrot.slane %v1194, %v1338
  %v1340 = vlaneseq
  %v1341 = vshrl.u32 %v1340, 7
  %v1342 = vsub.s32 0, %v1341
  %v1343 = vrot.slane %v1218, %v1342
  %v1344 = vlaneseq
  %v1345 = vshrl.u32 %v1344, 7
  %v1346 = vsub.s32 0, %v1345
  %v1347 = vrot.slane %v1232, %v1346
  %v1348 = vlaneseq
  %v1349 = vshrl.u32 %v1348, 7
  %v1350 = vsub.s32 0, %v1349
  %v1351 = vrot.slane %v1240, %v1350
  %v1352 = vlaneseq
  %v1353 = vshrl.u32 %v1352, 7
  %v1354 = vsub.s32 0, %v1353
  %v1355 = vrot.slane %v1242, %v1354
  %v1356 = vlaneseq
  %v1357 = vshrl.u32 %v1356, 7
  %v1358 = vsub.s32 0, %v1357
  %v1359 = vrot.slane %v1225, %v1358
  %v1360 = vlaneseq
  %v1361 = vshrl.u32 %v1360, 7
  %v1362 = vsub.s32 0, %v1361
  %v1363 = vrot.slane %v1239, %v1362
  %v1364 = vlaneseq
  %v1365 = vshrl.u32 %v1364, 7
  %v1366 = vsub.s32 0, %v1365
  %v1367 = vrot.slane %v1241, %v1366
  %v1368 = vlaneseq
  %v1369 = vshrl.u32 %v1368, 7
  %v1370 = vsub.s32 0, %v1369
  %v1371 = vrot.slane %v1243, %v1370
  %v1404 = vmul.f32 %v26, %v1247
  %v1405 = vmul.f32 %v27, %v1247
  %v1406 = vmul.f32 %v28, %v1251
  %v1407 = vmul.f32 %v29, %v1251
  %v1408 = vmul.f32 %v30, %v1255
  %v1409 = vmul.f32 %v31, %v1255
  %v1410 = vmul.f32 %v32, %v1259
  %v1411 = vmul.f32 %v33, %v1259
  %v1412 = vmul.f32 %v34, %v1263
  %v1413 = vmul.f32 %v35, %v1263
  %v1414 = vmul.f32 %v36, %v1267
  %v1415 = vmul.f32 %v37, %v1267
  %v1416 = vmul.f32 %v38, %v1271
  %v1417 = vmul.f32 %v39, %v1271
  %v1418 = vmul.f32 %v40, %v1275
  %v1419 = vmul.f32 %v41, %v1275
  %v1420 = vmul.f32 %v42, %v1279
  %v1421 = vmul.f32 %v43, %v1279
  %v1422 = vmul.f32 %v44, %v1283
  %v1423 = vmul.f32 %v45, %v1283
  %v1424 = vmul.f32 %v46, %v1287
  %v1425 = vmul.f32 %v47, %v1287
  %v1426 = vmul.f32 %v48, %v1291
  %v1427 = vmul.f32 %v49, %v1291
  %v1428 = vmul.f32 %v50, %v1295
  %v1429 = vmul.f32 %v51, %v1295
  %v1430 = vmul.f32 %v52, %v1299
  %v1431 = vmul.f32 %v53, %v1299
  %v1432 = vmul.f32 %v54, %v1303
  %v1433 = vmul.f32 %v55, %v1303
  %v1434 = vmul.f32 %v56, %v1307
  %v1435 = vmul.f32 %v57, %v1307
  %v1436 = vmul.f32 %v58, %v1311
  %v1437 = vmul.f32 %v59, %v1311
  %v1438 = vmul.f32 %v60, %v1315
  %v1439 = vmul.f32 %v61, %v1315
  %v1440 = vmul.f32 %v62, %v1319
  %v1441 = vmul.f32 %v63, %v1319
  %v1442 = vmul.f32 %v64, %v1323
  %v1443 = vmul.f32 %v65, %v1323
  %v1444 = vmul.f32 %v66, %v1327
  %v1445 = vmul.f32 %v67, %v1327
  %v1446 = vmul.f32 %v68, %v1331
  %v1447 = vmul.f32 %v69, %v1331
  %v1448 = vmul.f32 %v70, %v1335
  %v1449 = vmul.f32 %v71, %v1335
  %v1450 = vmul.f32 %v72, %v1339
  %v1451 = vmul.f32 %v73, %v1339
  %v1452 = vmul.f32 %v74, %v1343
  %v1453 = vmul.f32 %v75, %v1343
  %v1454 = vmul.f32 %v76, %v1347
  %v1455 = vmul.f32 %v77, %v1347
  %v1456 = vmul.f32 %v78, %v1351
  %v1457 = vmul.f32 %v79, %v1351
  %v1458 = vmul.f32 %v80, %v1355
  %v1459 = vmul.f32 %v81, %v1355
  %v1460 = vmul.f32 %v82, %v1359
  %v1461 = vmul.f32 %v83, %v1359
  %v1462 = vmul.f32 %v84, %v1363
  %v1463 = vmul.f32 %v85, %v1363
  %v1464 = vmul.f32 %v86, %v1367
  %v1465 = vmul.f32 %v87, %v1367
  %v1466 = vmul.f32 %v88, %v1371
  %v1467 = vmul.f32 %v89, %v1371
  %v1468 = vmul.f32 %v1404, %v1037
  %v1469 = vmul.f32 %v1405, %v1039
  %v1470 = vmul.f32 %v1406, %v1037
  %v1471 = vmul.f32 %v1407, %v1039
  %v1472 = vmul.f32 %v1408, %v1037
  %v1473 = vmul.f32 %v1409, %v1039
  %v1474 = vmul.f32 %v1410, %v1037
  %v1475 = vmul.f32 %v1411, %v1039
  %v1476 = vmul.f32 %v1412, %v1037
  %v1477 = vmul.f32 %v1413, %v1039
  %v1478 = vmul.f32 %v1414, %v1037
  %v1479 = vmul.f32 %v1415, %v1039
  %v1480 = vmul.f32 %v1416, %v1037
  %v1481 = vmul.f32 %v1417, %v1039
  %v1482 = vmul.f32 %v1418, %v1037
  %v1483 = vmul.f32 %v1419, %v1039
  %v1484 = vmul.f32 %v1420, %v1037
  %v1485 = vmul.f32 %v1421, %v1039
  %v1486 = vmul.f32 %v1422, %v1037
  %v1487 = vmul.f32 %v1423, %v1039
  %v1488 = vmul.f32 %v1424, %v1037
  %v1489 = vmul.f32 %v1425, %v1039
  %v1490 = vmul.f32 %v1426, %v1037
  %v1491 = vmul.f32 %v1427, %v1039
  %v1492 = vmul.f32 %v1428, %v1037
  %v1493 = vmul.f32 %v1429, %v1039
  %v1494 = vmul.f32 %v1430, %v1037
  %v1495 = vmul.f32 %v1431, %v1039
  %v1496 = vmul.f32 %v1432, %v1037
  %v1497 = vmul.f32 %v1433, %v1039
  %v1498 = vmul.f32 %v1434, %v1037
  %v1499 = vmul.f32 %v1435, %v1039
  %v1500 = vmul.f32 %v1436, %v1041
  %v1501 = vmul.f32 %v1437, %v1043
  %v1502 = vmul.f32 %v1438, %v1041
  %v1503 = vmul.f32 %v1439, %v1043
  %v1504 = vmul.f32 %v1440, %v1041
  %v1505 = vmul.f32 %v1441, %v1043
  %v1506 = vmul.f32 %v1442, %v1041
  %v1507 = vmul.f32 %v1443, %v1043
  %v1508 = vmul.f32 %v1444, %v1041
  %v1509 = vmul.f32 %v1445, %v1043
  %v1510 = vmul.f32 %v1446, %v1041
  %v1511 = vmul.f32 %v1447, %v1043
  %v1512 = vmul.f32 %v1448, %v1041
  %v1513 = vmul.f32 %v1449, %v1043
  %v1514 = vmul.f32 %v1450, %v1041
  %v1515 = vmul.f32 %v1451, %v1043
  %v1516 = vmul.f32 %v1452, %v1041
  %v1517 = vmul.f32 %v1453, %v1043
  %v1518 = vmul.f32 %v1454, %v1041
  %v1519 = vmul.f32 %v1455, %v1043
  %v1520 = vmul.f32 %v1456, %v1041
  %v1521 = vmul.f32 %v1457, %v1043
  %v1522 = vmul.f32 %v1458, %v1041
  %v1523 = vmul.f32 %v1459, %v1043
  %v1524 = vmul.f32 %v1460, %v1041
  %v1525 = vmul.f32 %v1461, %v1043
  %v1526 = vmul.f32 %v1462, %v1041
  %v1527 = vmul.f32 %v1463, %v1043
  %v1528 = vmul.f32 %v1464, %v1041
  %v1529 = vmul.f32 %v1465, %v1043
  %v1530 = vmul.f32 %v1466, %v1041
  %v1531 = vmul.f32 %v1467, %v1043
  %1532 = vst.msk [vmem:[%s7] sm:$0xff] %vm90, %v1468
  %1533 = vst.msk [vmem:[%s7 + $0x8] sm:$0xff] %vm90, %v1469
  %1534 = vst.msk [vmem:[%s7 + $0x10] sm:$0xff] %vm90, %v1470
  %1535 = vst.msk [vmem:[%s7 + $0x18] sm:$0xff] %vm90, %v1471
  %1536 = vst.msk [vmem:[%s7 + $0x20] sm:$0xff] %vm90, %v1472
  %1537 = vst.msk [vmem:[%s7 + $0x28] sm:$0xff] %vm90, %v1473
  %1538 = vst.msk [vmem:[%s7 + $0x30] sm:$0xff] %vm90, %v1474
  %1539 = vst.msk [vmem:[%s7 + $0x38] sm:$0xff] %vm90, %v1475
  %1540 = vst.msk [vmem:[%s7 + $0x40] sm:$0xff] %vm90, %v1476
  %1541 = vst.msk [vmem:[%s7 + $0x48] sm:$0xff] %vm90, %v1477
  %1542 = vst.msk [vmem:[%s7 + $0x50] sm:$0xff] %vm90, %v1478
  %1543 = vst.msk [vmem:[%s7 + $0x58] sm:$0xff] %vm90, %v1479
  %1544 = vst.msk [vmem:[%s7 + $0x60] sm:$0xff] %vm90, %v1480
  %1545 = vst.msk [vmem:[%s7 + $0x68] sm:$0xff] %vm90, %v1481
  %1546 = vst.msk [vmem:[%s7 + $0x70] sm:$0xff] %vm90, %v1482
  %1547 = vst.msk [vmem:[%s7 + $0x78] sm:$0xff] %vm90, %v1483
  %1548 = vst.msk [vmem:[%s7 + $0x80] sm:$0xff] %vm90, %v1484
  %1549 = vst.msk [vmem:[%s7 + $0x88] sm:$0xff] %vm90, %v1485
  %1550 = vst.msk [vmem:[%s7 + $0x90] sm:$0xff] %vm90, %v1486
  %1551 = vst.msk [vmem:[%s7 + $0x98] sm:$0xff] %vm90, %v1487
  %1552 = vst.msk [vmem:[%s7 + $0xa0] sm:$0xff] %vm90, %v1488
  %1553 = vst.msk [vmem:[%s7 + $0xa8] sm:$0xff] %vm90, %v1489
  %1554 = vst.msk [vmem:[%s7 + $0xb0] sm:$0xff] %vm90, %v1490
  %1555 = vst.msk [vmem:[%s7 + $0xb8] sm:$0xff] %vm90, %v1491
  %1556 = vst.msk [vmem:[%s7 + $0xc0] sm:$0xff] %vm90, %v1492
  %1557 = vst.msk [vmem:[%s7 + $0xc8] sm:$0xff] %vm90, %v1493
  %1558 = vst.msk [vmem:[%s7 + $0xd0] sm:$0xff] %vm90, %v1494
  %1559 = vst.msk [vmem:[%s7 + $0xd8] sm:$0xff] %vm90, %v1495
  %1560 = vst.msk [vmem:[%s7 + $0xe0] sm:$0xff] %vm90, %v1496
  %1561 = vst.msk [vmem:[%s7 + $0xe8] sm:$0xff] %vm90, %v1497
  %1562 = vst.msk [vmem:[%s7 + $0xf0] sm:$0xff] %vm90, %v1498
  %1563 = vst.msk [vmem:[%s7 + $0xf8] sm:$0xff] %vm90, %v1499
  %1564 = vst.msk [vmem:[%s7 + $0x100] sm:$0xff] %vm90, %v1500
  %1565 = vst.msk [vmem:[%s7 + $0x108] sm:$0xff] %vm90, %v1501
  %1566 = vst.msk [vmem:[%s7 + $0x110] sm:$0xff] %vm90, %v1502
  %1567 = vst.msk [vmem:[%s7 + $0x118] sm:$0xff] %vm90, %v1503
  %1568 = vst.msk [vmem:[%s7 + $0x120] sm:$0xff] %vm90, %v1504
  %1569 = vst.msk [vmem:[%s7 + $0x128] sm:$0xff] %vm90, %v1505
  %1570 = vst.msk [vmem:[%s7 + $0x130] sm:$0xff] %vm90, %v1506
  %1571 = vst.msk [vmem:[%s7 + $0x138] sm:$0xff] %vm90, %v1507
  %1572 = vst.msk [vmem:[%s7 + $0x140] sm:$0xff] %vm90, %v1508
  %1573 = vst.msk [vmem:[%s7 + $0x148] sm:$0xff] %vm90, %v1509
  %1574 = vst.msk [vmem:[%s7 + $0x150] sm:$0xff] %vm90, %v1510
  %1575 = vst.msk [vmem:[%s7 + $0x158] sm:$0xff] %vm90, %v1511
  %1576 = vst.msk [vmem:[%s7 + $0x160] sm:$0xff] %vm90, %v1512
  %1577 = vst.msk [vmem:[%s7 + $0x168] sm:$0xff] %vm90, %v1513
  %1578 = vst.msk [vmem:[%s7 + $0x170] sm:$0xff] %vm90, %v1514
  %1579 = vst.msk [vmem:[%s7 + $0x178] sm:$0xff] %vm90, %v1515
  %1580 = vst.msk [vmem:[%s7 + $0x180] sm:$0xff] %vm90, %v1516
  %1581 = vst.msk [vmem:[%s7 + $0x188] sm:$0xff] %vm90, %v1517
  %1582 = vst.msk [vmem:[%s7 + $0x190] sm:$0xff] %vm90, %v1518
  %1583 = vst.msk [vmem:[%s7 + $0x198] sm:$0xff] %vm90, %v1519
  %1584 = vst.msk [vmem:[%s7 + $0x1a0] sm:$0xff] %vm90, %v1520
  %1585 = vst.msk [vmem:[%s7 + $0x1a8] sm:$0xff] %vm90, %v1521
  %1586 = vst.msk [vmem:[%s7 + $0x1b0] sm:$0xff] %vm90, %v1522
  %1587 = vst.msk [vmem:[%s7 + $0x1b8] sm:$0xff] %vm90, %v1523
  %1588 = vst.msk [vmem:[%s7 + $0x1c0] sm:$0xff] %vm90, %v1524
  %1589 = vst.msk [vmem:[%s7 + $0x1c8] sm:$0xff] %vm90, %v1525
  %1590 = vst.msk [vmem:[%s7 + $0x1d0] sm:$0xff] %vm90, %v1526
  %1591 = vst.msk [vmem:[%s7 + $0x1d8] sm:$0xff] %vm90, %v1527
  %1592 = vst.msk [vmem:[%s7 + $0x1e0] sm:$0xff] %vm90, %v1528
  %1593 = vst.msk [vmem:[%s7 + $0x1e8] sm:$0xff] %vm90, %v1529
  %1594 = vst.msk [vmem:[%s7 + $0x1f0] sm:$0xff] %vm90, %v1530
  %1595 = vst.msk [vmem:[%s7 + $0x1f8] sm:$0xff] %vm90, %v1531
  // Predicated region
  $region30: #{tpu_custom_call.1} parent=0 // pred_check
    _
  $region31: #{tpu_custom_call.1} parent=0 // pred_check_branch
    %1597 = sbr.rel (0) target = $region33
  $region32: #{tpu_custom_call.1} parent=0 // pred_region
    _
  $region33: #{tpu_custom_call.1} parent=0 // pred_fallthru
    _
  // Predicated region
  $region34: #{tpu_custom_call.1} parent=0 // pred_check
    _
  $region35: #{tpu_custom_call.1} parent=0 // pred_check_branch
    %1599 = sbr.rel (0) target = $region37
  $region36: #{tpu_custom_call.1} parent=0 // pred_region
    _
  $region37: #{tpu_custom_call.1} parent=0 // pred_fallthru
    _

</llo_original>
